<compile_context>
chip_gen: v7x
topology: tpu7x:2x2x1
jax: 0.10.0
libtpu: 0.0.40
codegen_flags: <defaults>
</compile_context>

<pallas_src>
import numpy as np
import jax
import jax.numpy as jnp
from jax import lax
from jax.experimental import pallas as pl
from jax.experimental.pallas import tpu as pltpu

INPUT_SIZE = 10
HIDDEN_SIZE = 20
FUZZY_SIZE = 64
OUTPUT_SIZE = 1
SEQ_LEN = 8
BATCH = 8            # multiple of 8 -> fills all sublanes of a vreg

GATE = 128                   # per-gate padded width == padded hidden size (one lane-vreg)
NGATES = 4
GATES_W = NGATES * GATE      # 512: gate pre-activation tile is (B, 512)
HEAD_W = 128                 # lane width of the packed fuzzy/fc "head" slab


def _sigmoid(v):
    # tanh form (review suggestion): no f32 divide on the VALU, one EUP pass,
    # exact at v == 0 so zero-padded lanes stay exactly 0 through the recurrence.
    return 0.5 * (1.0 + jnp.tanh(0.5 * v))


def simple_lstm_kernel(x_ref, wihb_ref, whh_ref, head_ref, out_ref, hlast_ref, xp_ref):
    """Fused LSTM recurrence + fuzzy sigmoid layer + fc head.

    x_ref:    (S*B, I)          f32 VMEM  (x reshaped; row = t*B + b)
    wihb_ref: (I+1, 512)        f32 VMEM  rows 0..I-1 = W_ih^T (gate-padded H->128),
                                          row I = b_ih + b_hh (gate-padded)
    whh_ref:  (128, 512)        f32 VMEM  W_hh^T gate-padded; rows >= H are zero
    head_ref: (258, 128)        f32 VMEM  rows 0..127  = W_fz   (rows>=H zero, cols>=F zero)
                                          rows 128..255= W_fc^T (rows>=F zero, cols>=1 zero)
                                          row 256 = b_fz padded, row 257 = b_fc padded
    out_ref:   (B, 128)         f32 VMEM  lane 0 = module output (lane-dense store)
    hlast_ref: (B, 128)         f32 VMEM  lanes 0..H-1 = lstm_out[-1]
    xp_ref:    (S*B, 512)       f32 VMEM scratch: hoisted input projection
    """
    SB, I = x_ref.shape
    B = out_ref.shape[0]
    S = SB // B

    # ---- hoisted input projection: ONE MXU matmul for all timesteps, bias folded.
    xp_ref[...] = (
        jnp.dot(x_ref[...], wihb_ref[0:I, :], preferred_element_type=jnp.float32)
        + wihb_ref[I:I + 1, :])

    # ---- recurrence: exactly one MXU op per step, all slices vreg-aligned. -----
    def step(t, carry):
        h, c = carry
        row = pl.multiple_of(t * B, B)                               # aligned sublane start
        gates = xp_ref[pl.ds(row, B), :] + jnp.dot(
            h, whh_ref[...], preferred_element_type=jnp.float32)     # (B, 512), order i,f,g,o
        i_g = _sigmoid(gates[:, 0 * GATE:1 * GATE])
        f_g = _sigmoid(gates[:, 1 * GATE:2 * GATE])
        g_g = jnp.tanh(gates[:, 2 * GATE:3 * GATE])
        o_g = _sigmoid(gates[:, 3 * GATE:4 * GATE])
        c_new = f_g * c + i_g * g_g
        h_new = o_g * jnp.tanh(c_new)
        return h_new, c_new

    h0 = jnp.zeros((B, GATE), jnp.float32)
    c0 = jnp.zeros((B, GATE), jnp.float32)
    h_last, _ = lax.fori_loop(0, S, step, (h0, c0), unroll=True)

    # ---- fuzzy layer + fc head; both matmuls are (B,128)@(128,128), lane-dense.
    wfz = head_ref[0:GATE, :]                     # (128, 128)
    wfc = head_ref[GATE:2 * GATE, :]              # (128, 128)
    bfz = head_ref[2 * GATE:2 * GATE + 1, :]      # (1, 128)
    bfc = head_ref[2 * GATE + 1:2 * GATE + 2, :]  # (1, 128)

    # Padded fuzzy lanes (>=64) come out as sigmoid(0)=0.5, but W_fc rows >= 64
    # are zero, so they contribute nothing to the fc output.
    fuzzy = _sigmoid(jnp.dot(h_last, wfz, preferred_element_type=jnp.float32) + bfz)
    out_ref[...] = (jnp.dot(fuzzy, wfc, preferred_element_type=jnp.float32)
                    + bfc).astype(out_ref.dtype)
    hlast_ref[...] = h_last.astype(hlast_ref.dtype)


def _pad_gate_cols(w_t, h, gate=GATE):
    """(rows, 4*h) -> (rows, 4*gate): per-gate column blocks, zero padded."""
    rows = w_t.shape[0]
    out = np.zeros((rows, NGATES * gate), np.float32)
    for g in range(NGATES):
        out[:, g * gate:g * gate + h] = w_t[:, g * h:(g + 1) * h]
    return out


def prepare_params(w_ih, w_hh, b_ih, b_hh, w_fz, b_fz, w_fc, b_fc):
    """One-time transform: PyTorch-layout params -> 3 packed kernel operands."""
    h = np.asarray(w_hh).shape[1]
    fz = np.asarray(w_fz).shape[1]
    od = np.asarray(w_fc).shape[0]
    assert h <= GATE and fz <= HEAD_W and od <= HEAD_W

    # [W_ih^T ; b_ih + b_hh], per-gate column padding H -> GATE.
    wih_t = _pad_gate_cols(np.asarray(w_ih, np.float32).T, h)                   # (I, 512)
    b_sum = (np.asarray(b_ih, np.float32) + np.asarray(b_hh, np.float32))[None, :]
    b_p = _pad_gate_cols(b_sum, h)                                              # (1, 512)
    wihb = np.concatenate([wih_t, b_p], axis=0)                                 # (I+1, 512)

    # W_hh^T, padded to (GATE, 512); rows >= h are zero.
    whh_t = _pad_gate_cols(np.asarray(w_hh, np.float32).T, h)                   # (H, 512)
    whh_p = np.zeros((GATE, NGATES * GATE), np.float32)
    whh_p[:h, :] = whh_t

    # Packed head slab: [W_fz ; W_fc^T ; b_fz ; b_fc], all 128 lanes wide.
    head = np.zeros((2 * GATE + 2, HEAD_W), np.float32)
    head[:h, :fz] = np.asarray(w_fz, np.float32)
    head[GATE:GATE + fz, :od] = np.asarray(w_fc, np.float32).T
    head[2 * GATE, :fz] = np.asarray(b_fz, np.float32)
    head[2 * GATE + 1, :od] = np.asarray(b_fc, np.float32)

    return jnp.asarray(wihb), jnp.asarray(whh_p), jnp.asarray(head)


@jax.jit
def simple_lstm_forward(x, wihb, whh_p, head):
    """Returns (out (B, OUTPUT_SIZE), h_last (B, HIDDEN_SIZE))."""
    S, B, I = x.shape
    x2d = x.reshape(S * B, I).astype(jnp.float32)   # row = t*B + b (layout plumbing, free)
    out_pad, h_pad = pl.pallas_call(
        simple_lstm_kernel,
        out_shape=(
            jax.ShapeDtypeStruct((B, HEAD_W), jnp.float32),  # fc output in lane 0
            jax.ShapeDtypeStruct((B, GATE), jnp.float32),    # h_T in lanes 0..H-1
        ),
        in_specs=[pl.BlockSpec(memory_space=pltpu.MemorySpace.VMEM)] * 4,
        out_specs=(
            pl.BlockSpec(memory_space=pltpu.MemorySpace.VMEM),
            pl.BlockSpec(memory_space=pltpu.MemorySpace.VMEM),
        ),
        scratch_shapes=[pltpu.VMEM((S * B, NGATES * GATE), jnp.float32)],
    )(x2d, wihb, whh_p, head)
    return out_pad[:, :OUTPUT_SIZE], h_pad[:, :HIDDEN_SIZE]


def _ref_forward(x, w_ih, w_hh, b_ih, b_hh, w_fz, b_fz, w_fc, b_fc):
    """Pure-NumPy (float64) reference reproducing the PyTorch module math."""
    def sig(v):
        return 1.0 / (1.0 + np.exp(-v))
    S, B, _ = x.shape
    H = w_hh.shape[1]
    h = np.zeros((B, H), np.float64)
    c = np.zeros((B, H), np.float64)
    for t in range(S):
        gates = x[t] @ w_ih.T + b_ih + h @ w_hh.T + b_hh    # (B, 4H), order i,f,g,o
        i = sig(gates[:, 0 * H:1 * H])
        f = sig(gates[:, 1 * H:2 * H])
        g = np.tanh(gates[:, 2 * H:3 * H])
        o = sig(gates[:, 3 * H:4 * H])
        c = f * c + i * g
        h = o * np.tanh(c)
    fuzzy = sig(h @ w_fz + b_fz)
    out = fuzzy @ w_fc.T + b_fc
    return out, h


if __name__ == "__main__":
    key = jax.random.PRNGKey(0)
    ks = jax.random.split(key, 8)
    k_lstm = 1.0 / np.sqrt(HIDDEN_SIZE)   # PyTorch nn.LSTM init scale
    k_fc = 1.0 / np.sqrt(FUZZY_SIZE)      # PyTorch nn.Linear init scale

    x = jax.random.normal(ks[0], (SEQ_LEN, BATCH, INPUT_SIZE), jnp.float32)
    w_ih = jax.random.uniform(ks[1], (4 * HIDDEN_SIZE, INPUT_SIZE), jnp.float32, -k_lstm, k_lstm)
    w_hh = jax.random.uniform(ks[2], (4 * HIDDEN_SIZE, HIDDEN_SIZE), jnp.float32, -k_lstm, k_lstm)
    b_ih = jax.random.uniform(ks[3], (4 * HIDDEN_SIZE,), jnp.float32, -k_lstm, k_lstm)
    b_hh = jax.random.uniform(ks[4], (4 * HIDDEN_SIZE,), jnp.float32, -k_lstm, k_lstm)
    w_fz = jax.random.normal(ks[5], (HIDDEN_SIZE, FUZZY_SIZE), jnp.float32)   # torch.randn
    b_fz = jnp.zeros((FUZZY_SIZE,), jnp.float32)                              # torch.zeros
    w_fc = jax.random.uniform(ks[6], (OUTPUT_SIZE, FUZZY_SIZE), jnp.float32, -k_fc, k_fc)
    b_fc = jax.random.uniform(ks[7], (OUTPUT_SIZE,), jnp.float32, -k_fc, k_fc)

    params = prepare_params(np.asarray(w_ih), np.asarray(w_hh),
                            np.asarray(b_ih), np.asarray(b_hh),
                            np.asarray(w_fz), np.asarray(b_fz),
                            np.asarray(w_fc), np.asarray(b_fc))

    out, h_last = simple_lstm_forward(x, *params)
    jax.block_until_ready((out, h_last))

    ref_out, ref_h = _ref_forward(
        np.asarray(x, np.float64),
        np.asarray(w_ih, np.float64), np.asarray(w_hh, np.float64),
        np.asarray(b_ih, np.float64), np.asarray(b_hh, np.float64),
        np.asarray(w_fz, np.float64), np.asarray(b_fz, np.float64),
        np.asarray(w_fc, np.float64), np.asarray(b_fc, np.float64))

    # Tolerance accommodates possible reduced-precision MXU passes for f32 matmuls;
    # structural errors (wrong gate order / recurrence) would be O(1).
    np.testing.assert_allclose(np.asarray(h_last), ref_h, rtol=2e-2, atol=2e-2)
    np.testing.assert_allclose(np.asarray(out), ref_out, rtol=2e-2, atol=2e-2)

    print("KERNEL_OK")
</pallas_src>

<mosaic_0001>
module attributes {stable_mosaic.version = 11 : i64} {
  func.func @simple_lstm_kernel(%arg0: memref<64x10xf32, #tpu.memory_space<vmem>>, %arg1: memref<11x512xf32, #tpu.memory_space<vmem>>, %arg2: memref<128x512xf32, #tpu.memory_space<vmem>>, %arg3: memref<258x128xf32, #tpu.memory_space<vmem>>, %arg4: memref<8x128xf32, #tpu.memory_space<vmem>>, %arg5: memref<8x128xf32, #tpu.memory_space<vmem>>, %arg6: memref<64x512xf32, #tpu.memory_space<vmem>>) attributes {dimension_semantics = [], scalar_prefetch = 0 : i64, scratch_operands = 1 : i64, tpu.core_type = #tpu.core_type<tc>} {
    %c0 = arith.constant 0 : index
    %c0_0 = arith.constant 0 : index
    %0 = vector.load %arg0[%c0, %c0_0] : memref<64x10xf32, #tpu.memory_space<vmem>>, vector<64x10xf32>
    %c0_1 = arith.constant 0 : index
    %c0_2 = arith.constant 0 : index
    %1 = vector.load %arg1[%c0_1, %c0_2] : memref<11x512xf32, #tpu.memory_space<vmem>>, vector<10x512xf32>
    %cst = arith.constant dense<0.000000e+00> : vector<64x512xf32>
    %2 = tpu.matmul %0, %1, %cst {dimension_numbers = #tpu.dot_dimension_numbers<[1], [0], [0], [1], [0, 0, 1, 1], [], []>} : vector<64x10xf32>, vector<10x512xf32>, vector<64x512xf32> -> vector<64x512xf32>
    %c10 = arith.constant 10 : index
    %c0_3 = arith.constant 0 : index
    %3 = vector.load %arg1[%c10, %c0_3] : memref<11x512xf32, #tpu.memory_space<vmem>>, vector<1x512xf32>
    %4 = vector.broadcast %3 : vector<1x512xf32> to vector<64x512xf32>
    %5 = arith.addf %2, %4 : vector<64x512xf32>
    %c0_4 = arith.constant 0 : index
    %c0_5 = arith.constant 0 : index
    %6 = vector.load %arg6[%c0_4, %c0_5] : memref<64x512xf32, #tpu.memory_space<vmem>>, vector<64x512xf32>
    tpu.vector_store %arg6[%c0_4, %c0_5], %5 {strides = array<i32>} : memref<64x512xf32, #tpu.memory_space<vmem>>, vector<64x512xf32>,
    %cst_6 = arith.constant 0.000000e+00 : f32
    %7 = vector.broadcast %cst_6 : f32 to vector<8x128xf32>
    %cst_7 = arith.constant 0.000000e+00 : f32
    %8 = vector.broadcast %cst_7 : f32 to vector<8x128xf32>
    %c0_i32 = arith.constant 0 : i32
    %c8_i32 = arith.constant 8 : i32
    %9 = arith.muli %c0_i32, %c8_i32 : i32
    %10 = tpu.assume_multiple %9, 8 : i32
    %11 = arith.index_cast %10 : i32 to index
    %c0_8 = arith.constant 0 : index
    %12 = vector.load %arg6[%11, %c0_8] : memref<64x512xf32, #tpu.memory_space<vmem>>, vector<8x512xf32>
    %c0_9 = arith.constant 0 : index
    %c0_10 = arith.constant 0 : index
    %13 = vector.load %arg2[%c0_9, %c0_10] : memref<128x512xf32, #tpu.memory_space<vmem>>, vector<128x512xf32>
    %cst_11 = arith.constant dense<0.000000e+00> : vector<8x512xf32>
    %14 = tpu.matmul %7, %13, %cst_11 {dimension_numbers = #tpu.dot_dimension_numbers<[1], [0], [0], [1], [0, 0, 1, 1], [], []>} : vector<8x128xf32>, vector<128x512xf32>, vector<8x512xf32> -> vector<8x512xf32>
    %15 = arith.addf %12, %14 : vector<8x512xf32>
    %16 = vector.extract_strided_slice %15 {offsets = [0, 0], sizes = [8, 128], strides = [1, 1]} : vector<8x512xf32> to vector<8x128xf32>
    %cst_12 = arith.constant 5.000000e-01 : f32
    %17 = vector.broadcast %cst_12 : f32 to vector<8x128xf32>
    %18 = arith.mulf %17, %16 : vector<8x128xf32>
    %19 = math.tanh %18 : vector<8x128xf32>
    %cst_13 = arith.constant 1.000000e+00 : f32
    %20 = vector.broadcast %cst_13 : f32 to vector<8x128xf32>
    %21 = arith.addf %20, %19 : vector<8x128xf32>
    %cst_14 = arith.constant 5.000000e-01 : f32
    %22 = vector.broadcast %cst_14 : f32 to vector<8x128xf32>
    %23 = arith.mulf %22, %21 : vector<8x128xf32>
    %24 = vector.extract_strided_slice %15 {offsets = [0, 128], sizes = [8, 128], strides = [1, 1]} : vector<8x512xf32> to vector<8x128xf32>
    %cst_15 = arith.constant 5.000000e-01 : f32
    %25 = vector.broadcast %cst_15 : f32 to vector<8x128xf32>
    %26 = arith.mulf %25, %24 : vector<8x128xf32>
    %27 = math.tanh %26 : vector<8x128xf32>
    %cst_16 = arith.constant 1.000000e+00 : f32
    %28 = vector.broadcast %cst_16 : f32 to vector<8x128xf32>
    %29 = arith.addf %28, %27 : vector<8x128xf32>
    %cst_17 = arith.constant 5.000000e-01 : f32
    %30 = vector.broadcast %cst_17 : f32 to vector<8x128xf32>
    %31 = arith.mulf %30, %29 : vector<8x128xf32>
    %32 = vector.extract_strided_slice %15 {offsets = [0, 256], sizes = [8, 128], strides = [1, 1]} : vector<8x512xf32> to vector<8x128xf32>
    %33 = math.tanh %32 : vector<8x128xf32>
    %34 = vector.extract_strided_slice %15 {offsets = [0, 384], sizes = [8, 128], strides = [1, 1]} : vector<8x512xf32> to vector<8x128xf32>
    %cst_18 = arith.constant 5.000000e-01 : f32
    %35 = vector.broadcast %cst_18 : f32 to vector<8x128xf32>
    %36 = arith.mulf %35, %34 : vector<8x128xf32>
    %37 = math.tanh %36 : vector<8x128xf32>
    %cst_19 = arith.constant 1.000000e+00 : f32
    %38 = vector.broadcast %cst_19 : f32 to vector<8x128xf32>
    %39 = arith.addf %38, %37 : vector<8x128xf32>
    %cst_20 = arith.constant 5.000000e-01 : f32
    %40 = vector.broadcast %cst_20 : f32 to vector<8x128xf32>
    %41 = arith.mulf %40, %39 : vector<8x128xf32>
    %42 = arith.mulf %31, %8 : vector<8x128xf32>
    %43 = arith.mulf %23, %33 : vector<8x128xf32>
    %44 = arith.addf %42, %43 : vector<8x128xf32>
    %45 = math.tanh %44 : vector<8x128xf32>
    %46 = arith.mulf %41, %45 : vector<8x128xf32>
    %c1_i32 = arith.constant 1 : i32
    %c8_i32_21 = arith.constant 8 : i32
    %47 = arith.muli %c1_i32, %c8_i32_21 : i32
    %48 = tpu.assume_multiple %47, 8 : i32
    %49 = arith.index_cast %48 : i32 to index
    %c0_22 = arith.constant 0 : index
    %50 = vector.load %arg6[%49, %c0_22] : memref<64x512xf32, #tpu.memory_space<vmem>>, vector<8x512xf32>
    %c0_23 = arith.constant 0 : index
    %c0_24 = arith.constant 0 : index
    %51 = vector.load %arg2[%c0_23, %c0_24] : memref<128x512xf32, #tpu.memory_space<vmem>>, vector<128x512xf32>
    %cst_25 = arith.constant dense<0.000000e+00> : vector<8x512xf32>
    %52 = tpu.matmul %46, %51, %cst_25 {dimension_numbers = #tpu.dot_dimension_numbers<[1], [0], [0], [1], [0, 0, 1, 1], [], []>} : vector<8x128xf32>, vector<128x512xf32>, vector<8x512xf32> -> vector<8x512xf32>
    %53 = arith.addf %50, %52 : vector<8x512xf32>
    %54 = vector.extract_strided_slice %53 {offsets = [0, 0], sizes = [8, 128], strides = [1, 1]} : vector<8x512xf32> to vector<8x128xf32>
    %cst_26 = arith.constant 5.000000e-01 : f32
    %55 = vector.broadcast %cst_26 : f32 to vector<8x128xf32>
    %56 = arith.mulf %55, %54 : vector<8x128xf32>
    %57 = math.tanh %56 : vector<8x128xf32>
    %cst_27 = arith.constant 1.000000e+00 : f32
    %58 = vector.broadcast %cst_27 : f32 to vector<8x128xf32>
    %59 = arith.addf %58, %57 : vector<8x128xf32>
    %cst_28 = arith.constant 5.000000e-01 : f32
    %60 = vector.broadcast %cst_28 : f32 to vector<8x128xf32>
    %61 = arith.mulf %60, %59 : vector<8x128xf32>
    %62 = vector.extract_strided_slice %53 {offsets = [0, 128], sizes = [8, 128], strides = [1, 1]} : vector<8x512xf32> to vector<8x128xf32>
    %cst_29 = arith.constant 5.000000e-01 : f32
    %63 = vector.broadcast %cst_29 : f32 to vector<8x128xf32>
    %64 = arith.mulf %63, %62 : vector<8x128xf32>
    %65 = math.tanh %64 : vector<8x128xf32>
    %cst_30 = arith.constant 1.000000e+00 : f32
    %66 = vector.broadcast %cst_30 : f32 to vector<8x128xf32>
    %67 = arith.addf %66, %65 : vector<8x128xf32>
    %cst_31 = arith.constant 5.000000e-01 : f32
    %68 = vector.broadcast %cst_31 : f32 to vector<8x128xf32>
    %69 = arith.mulf %68, %67 : vector<8x128xf32>
    %70 = vector.extract_strided_slice %53 {offsets = [0, 256], sizes = [8, 128], strides = [1, 1]} : vector<8x512xf32> to vector<8x128xf32>
    %71 = math.tanh %70 : vector<8x128xf32>
    %72 = vector.extract_strided_slice %53 {offsets = [0, 384], sizes = [8, 128], strides = [1, 1]} : vector<8x512xf32> to vector<8x128xf32>
    %cst_32 = arith.constant 5.000000e-01 : f32
    %73 = vector.broadcast %cst_32 : f32 to vector<8x128xf32>
    %74 = arith.mulf %73, %72 : vector<8x128xf32>
    %75 = math.tanh %74 : vector<8x128xf32>
    %cst_33 = arith.constant 1.000000e+00 : f32
    %76 = vector.broadcast %cst_33 : f32 to vector<8x128xf32>
    %77 = arith.addf %76, %75 : vector<8x128xf32>
    %cst_34 = arith.constant 5.000000e-01 : f32
    %78 = vector.broadcast %cst_34 : f32 to vector<8x128xf32>
    %79 = arith.mulf %78, %77 : vector<8x128xf32>
    %80 = arith.mulf %69, %44 : vector<8x128xf32>
    %81 = arith.mulf %61, %71 : vector<8x128xf32>
    %82 = arith.addf %80, %81 : vector<8x128xf32>
    %83 = math.tanh %82 : vector<8x128xf32>
    %84 = arith.mulf %79, %83 : vector<8x128xf32>
    %c2_i32 = arith.constant 2 : i32
    %c8_i32_35 = arith.constant 8 : i32
    %85 = arith.muli %c2_i32, %c8_i32_35 : i32
    %86 = tpu.assume_multiple %85, 8 : i32
    %87 = arith.index_cast %86 : i32 to index
    %c0_36 = arith.constant 0 : index
    %88 = vector.load %arg6[%87, %c0_36] : memref<64x512xf32, #tpu.memory_space<vmem>>, vector<8x512xf32>
    %c0_37 = arith.constant 0 : index
    %c0_38 = arith.constant 0 : index
    %89 = vector.load %arg2[%c0_37, %c0_38] : memref<128x512xf32, #tpu.memory_space<vmem>>, vector<128x512xf32>
    %cst_39 = arith.constant dense<0.000000e+00> : vector<8x512xf32>
    %90 = tpu.matmul %84, %89, %cst_39 {dimension_numbers = #tpu.dot_dimension_numbers<[1], [0], [0], [1], [0, 0, 1, 1], [], []>} : vector<8x128xf32>, vector<128x512xf32>, vector<8x512xf32> -> vector<8x512xf32>
    %91 = arith.addf %88, %90 : vector<8x512xf32>
    %92 = vector.extract_strided_slice %91 {offsets = [0, 0], sizes = [8, 128], strides = [1, 1]} : vector<8x512xf32> to vector<8x128xf32>
    %cst_40 = arith.constant 5.000000e-01 : f32
    %93 = vector.broadcast %cst_40 : f32 to vector<8x128xf32>
    %94 = arith.mulf %93, %92 : vector<8x128xf32>
    %95 = math.tanh %94 : vector<8x128xf32>
    %cst_41 = arith.constant 1.000000e+00 : f32
    %96 = vector.broadcast %cst_41 : f32 to vector<8x128xf32>
    %97 = arith.addf %96, %95 : vector<8x128xf32>
    %cst_42 = arith.constant 5.000000e-01 : f32
    %98 = vector.broadcast %cst_42 : f32 to vector<8x128xf32>
    %99 = arith.mulf %98, %97 : vector<8x128xf32>
    %100 = vector.extract_strided_slice %91 {offsets = [0, 128], sizes = [8, 128], strides = [1, 1]} : vector<8x512xf32> to vector<8x128xf32>
    %cst_43 = arith.constant 5.000000e-01 : f32
    %101 = vector.broadcast %cst_43 : f32 to vector<8x128xf32>
    %102 = arith.mulf %101, %100 : vector<8x128xf32>
    %103 = math.tanh %102 : vector<8x128xf32>
    %cst_44 = arith.constant 1.000000e+00 : f32
    %104 = vector.broadcast %cst_44 : f32 to vector<8x128xf32>
    %105 = arith.addf %104, %103 : vector<8x128xf32>
    %cst_45 = arith.constant 5.000000e-01 : f32
    %106 = vector.broadcast %cst_45 : f32 to vector<8x128xf32>
    %107 = arith.mulf %106, %105 : vector<8x128xf32>
    %108 = vector.extract_strided_slice %91 {offsets = [0, 256], sizes = [8, 128], strides = [1, 1]} : vector<8x512xf32> to vector<8x128xf32>
    %109 = math.tanh %108 : vector<8x128xf32>
    %110 = vector.extract_strided_slice %91 {offsets = [0, 384], sizes = [8, 128], strides = [1, 1]} : vector<8x512xf32> to vector<8x128xf32>
    %cst_46 = arith.constant 5.000000e-01 : f32
    %111 = vector.broadcast %cst_46 : f32 to vector<8x128xf32>
    %112 = arith.mulf %111, %110 : vector<8x128xf32>
    %113 = math.tanh %112 : vector<8x128xf32>
    %cst_47 = arith.constant 1.000000e+00 : f32
    %114 = vector.broadcast %cst_47 : f32 to vector<8x128xf32>
    %115 = arith.addf %114, %113 : vector<8x128xf32>
    %cst_48 = arith.constant 5.000000e-01 : f32
    %116 = vector.broadcast %cst_48 : f32 to vector<8x128xf32>
    %117 = arith.mulf %116, %115 : vector<8x128xf32>
    %118 = arith.mulf %107, %82 : vector<8x128xf32>
    %119 = arith.mulf %99, %109 : vector<8x128xf32>
    %120 = arith.addf %118, %119 : vector<8x128xf32>
    %121 = math.tanh %120 : vector<8x128xf32>
    %122 = arith.mulf %117, %121 : vector<8x128xf32>
    %c3_i32 = arith.constant 3 : i32
    %c8_i32_49 = arith.constant 8 : i32
    %123 = arith.muli %c3_i32, %c8_i32_49 : i32
    %124 = tpu.assume_multiple %123, 8 : i32
    %125 = arith.index_cast %124 : i32 to index
    %c0_50 = arith.constant 0 : index
    %126 = vector.load %arg6[%125, %c0_50] : memref<64x512xf32, #tpu.memory_space<vmem>>, vector<8x512xf32>
    %c0_51 = arith.constant 0 : index
    %c0_52 = arith.constant 0 : index
    %127 = vector.load %arg2[%c0_51, %c0_52] : memref<128x512xf32, #tpu.memory_space<vmem>>, vector<128x512xf32>
    %cst_53 = arith.constant dense<0.000000e+00> : vector<8x512xf32>
    %128 = tpu.matmul %122, %127, %cst_53 {dimension_numbers = #tpu.dot_dimension_numbers<[1], [0], [0], [1], [0, 0, 1, 1], [], []>} : vector<8x128xf32>, vector<128x512xf32>, vector<8x512xf32> -> vector<8x512xf32>
    %129 = arith.addf %126, %128 : vector<8x512xf32>
    %130 = vector.extract_strided_slice %129 {offsets = [0, 0], sizes = [8, 128], strides = [1, 1]} : vector<8x512xf32> to vector<8x128xf32>
    %cst_54 = arith.constant 5.000000e-01 : f32
    %131 = vector.broadcast %cst_54 : f32 to vector<8x128xf32>
    %132 = arith.mulf %131, %130 : vector<8x128xf32>
    %133 = math.tanh %132 : vector<8x128xf32>
    %cst_55 = arith.constant 1.000000e+00 : f32
    %134 = vector.broadcast %cst_55 : f32 to vector<8x128xf32>
    %135 = arith.addf %134, %133 : vector<8x128xf32>
    %cst_56 = arith.constant 5.000000e-01 : f32
    %136 = vector.broadcast %cst_56 : f32 to vector<8x128xf32>
    %137 = arith.mulf %136, %135 : vector<8x128xf32>
    %138 = vector.extract_strided_slice %129 {offsets = [0, 128], sizes = [8, 128], strides = [1, 1]} : vector<8x512xf32> to vector<8x128xf32>
    %cst_57 = arith.constant 5.000000e-01 : f32
    %139 = vector.broadcast %cst_57 : f32 to vector<8x128xf32>
    %140 = arith.mulf %139, %138 : vector<8x128xf32>
    %141 = math.tanh %140 : vector<8x128xf32>
    %cst_58 = arith.constant 1.000000e+00 : f32
    %142 = vector.broadcast %cst_58 : f32 to vector<8x128xf32>
    %143 = arith.addf %142, %141 : vector<8x128xf32>
    %cst_59 = arith.constant 5.000000e-01 : f32
    %144 = vector.broadcast %cst_59 : f32 to vector<8x128xf32>
    %145 = arith.mulf %144, %143 : vector<8x128xf32>
    %146 = vector.extract_strided_slice %129 {offsets = [0, 256], sizes = [8, 128], strides = [1, 1]} : vector<8x512xf32> to vector<8x128xf32>
    %147 = math.tanh %146 : vector<8x128xf32>
    %148 = vector.extract_strided_slice %129 {offsets = [0, 384], sizes = [8, 128], strides = [1, 1]} : vector<8x512xf32> to vector<8x128xf32>
    %cst_60 = arith.constant 5.000000e-01 : f32
    %149 = vector.broadcast %cst_60 : f32 to vector<8x128xf32>
    %150 = arith.mulf %149, %148 : vector<8x128xf32>
    %151 = math.tanh %150 : vector<8x128xf32>
    %cst_61 = arith.constant 1.000000e+00 : f32
    %152 = vector.broadcast %cst_61 : f32 to vector<8x128xf32>
    %153 = arith.addf %152, %151 : vector<8x128xf32>
    %cst_62 = arith.constant 5.000000e-01 : f32
    %154 = vector.broadcast %cst_62 : f32 to vector<8x128xf32>
    %155 = arith.mulf %154, %153 : vector<8x128xf32>
    %156 = arith.mulf %145, %120 : vector<8x128xf32>
    %157 = arith.mulf %137, %147 : vector<8x128xf32>
    %158 = arith.addf %156, %157 : vector<8x128xf32>
    %159 = math.tanh %158 : vector<8x128xf32>
    %160 = arith.mulf %155, %159 : vector<8x128xf32>
    %c4_i32 = arith.constant 4 : i32
    %c8_i32_63 = arith.constant 8 : i32
    %161 = arith.muli %c4_i32, %c8_i32_63 : i32
    %162 = tpu.assume_multiple %161, 8 : i32
    %163 = arith.index_cast %162 : i32 to index
    %c0_64 = arith.constant 0 : index
    %164 = vector.load %arg6[%163, %c0_64] : memref<64x512xf32, #tpu.memory_space<vmem>>, vector<8x512xf32>
    %c0_65 = arith.constant 0 : index
    %c0_66 = arith.constant 0 : index
    %165 = vector.load %arg2[%c0_65, %c0_66] : memref<128x512xf32, #tpu.memory_space<vmem>>, vector<128x512xf32>
    %cst_67 = arith.constant dense<0.000000e+00> : vector<8x512xf32>
    %166 = tpu.matmul %160, %165, %cst_67 {dimension_numbers = #tpu.dot_dimension_numbers<[1], [0], [0], [1], [0, 0, 1, 1], [], []>} : vector<8x128xf32>, vector<128x512xf32>, vector<8x512xf32> -> vector<8x512xf32>
    %167 = arith.addf %164, %166 : vector<8x512xf32>
    %168 = vector.extract_strided_slice %167 {offsets = [0, 0], sizes = [8, 128], strides = [1, 1]} : vector<8x512xf32> to vector<8x128xf32>
    %cst_68 = arith.constant 5.000000e-01 : f32
    %169 = vector.broadcast %cst_68 : f32 to vector<8x128xf32>
    %170 = arith.mulf %169, %168 : vector<8x128xf32>
    %171 = math.tanh %170 : vector<8x128xf32>
    %cst_69 = arith.constant 1.000000e+00 : f32
    %172 = vector.broadcast %cst_69 : f32 to vector<8x128xf32>
    %173 = arith.addf %172, %171 : vector<8x128xf32>
    %cst_70 = arith.constant 5.000000e-01 : f32
    %174 = vector.broadcast %cst_70 : f32 to vector<8x128xf32>
    %175 = arith.mulf %174, %173 : vector<8x128xf32>
    %176 = vector.extract_strided_slice %167 {offsets = [0, 128], sizes = [8, 128], strides = [1, 1]} : vector<8x512xf32> to vector<8x128xf32>
    %cst_71 = arith.constant 5.000000e-01 : f32
    %177 = vector.broadcast %cst_71 : f32 to vector<8x128xf32>
    %178 = arith.mulf %177, %176 : vector<8x128xf32>
    %179 = math.tanh %178 : vector<8x128xf32>
    %cst_72 = arith.constant 1.000000e+00 : f32
    %180 = vector.broadcast %cst_72 : f32 to vector<8x128xf32>
    %181 = arith.addf %180, %179 : vector<8x128xf32>
    %cst_73 = arith.constant 5.000000e-01 : f32
    %182 = vector.broadcast %cst_73 : f32 to vector<8x128xf32>
    %183 = arith.mulf %182, %181 : vector<8x128xf32>
    %184 = vector.extract_strided_slice %167 {offsets = [0, 256], sizes = [8, 128], strides = [1, 1]} : vector<8x512xf32> to vector<8x128xf32>
    %185 = math.tanh %184 : vector<8x128xf32>
    %186 = vector.extract_strided_slice %167 {offsets = [0, 384], sizes = [8, 128], strides = [1, 1]} : vector<8x512xf32> to vector<8x128xf32>
    %cst_74 = arith.constant 5.000000e-01 : f32
    %187 = vector.broadcast %cst_74 : f32 to vector<8x128xf32>
    %188 = arith.mulf %187, %186 : vector<8x128xf32>
    %189 = math.tanh %188 : vector<8x128xf32>
    %cst_75 = arith.constant 1.000000e+00 : f32
    %190 = vector.broadcast %cst_75 : f32 to vector<8x128xf32>
    %191 = arith.addf %190, %189 : vector<8x128xf32>
    %cst_76 = arith.constant 5.000000e-01 : f32
    %192 = vector.broadcast %cst_76 : f32 to vector<8x128xf32>
    %193 = arith.mulf %192, %191 : vector<8x128xf32>
    %194 = arith.mulf %183, %158 : vector<8x128xf32>
    %195 = arith.mulf %175, %185 : vector<8x128xf32>
    %196 = arith.addf %194, %195 : vector<8x128xf32>
    %197 = math.tanh %196 : vector<8x128xf32>
    %198 = arith.mulf %193, %197 : vector<8x128xf32>
    %c5_i32 = arith.constant 5 : i32
    %c8_i32_77 = arith.constant 8 : i32
    %199 = arith.muli %c5_i32, %c8_i32_77 : i32
    %200 = tpu.assume_multiple %199, 8 : i32
    %201 = arith.index_cast %200 : i32 to index
    %c0_78 = arith.constant 0 : index
    %202 = vector.load %arg6[%201, %c0_78] : memref<64x512xf32, #tpu.memory_space<vmem>>, vector<8x512xf32>
    %c0_79 = arith.constant 0 : index
    %c0_80 = arith.constant 0 : index
    %203 = vector.load %arg2[%c0_79, %c0_80] : memref<128x512xf32, #tpu.memory_space<vmem>>, vector<128x512xf32>
    %cst_81 = arith.constant dense<0.000000e+00> : vector<8x512xf32>
    %204 = tpu.matmul %198, %203, %cst_81 {dimension_numbers = #tpu.dot_dimension_numbers<[1], [0], [0], [1], [0, 0, 1, 1], [], []>} : vector<8x128xf32>, vector<128x512xf32>, vector<8x512xf32> -> vector<8x512xf32>
    %205 = arith.addf %202, %204 : vector<8x512xf32>
    %206 = vector.extract_strided_slice %205 {offsets = [0, 0], sizes = [8, 128], strides = [1, 1]} : vector<8x512xf32> to vector<8x128xf32>
    %cst_82 = arith.constant 5.000000e-01 : f32
    %207 = vector.broadcast %cst_82 : f32 to vector<8x128xf32>
    %208 = arith.mulf %207, %206 : vector<8x128xf32>
    %209 = math.tanh %208 : vector<8x128xf32>
    %cst_83 = arith.constant 1.000000e+00 : f32
    %210 = vector.broadcast %cst_83 : f32 to vector<8x128xf32>
    %211 = arith.addf %210, %209 : vector<8x128xf32>
    %cst_84 = arith.constant 5.000000e-01 : f32
    %212 = vector.broadcast %cst_84 : f32 to vector<8x128xf32>
    %213 = arith.mulf %212, %211 : vector<8x128xf32>
    %214 = vector.extract_strided_slice %205 {offsets = [0, 128], sizes = [8, 128], strides = [1, 1]} : vector<8x512xf32> to vector<8x128xf32>
    %cst_85 = arith.constant 5.000000e-01 : f32
    %215 = vector.broadcast %cst_85 : f32 to vector<8x128xf32>
    %216 = arith.mulf %215, %214 : vector<8x128xf32>
    %217 = math.tanh %216 : vector<8x128xf32>
    %cst_86 = arith.constant 1.000000e+00 : f32
    %218 = vector.broadcast %cst_86 : f32 to vector<8x128xf32>
    %219 = arith.addf %218, %217 : vector<8x128xf32>
    %cst_87 = arith.constant 5.000000e-01 : f32
    %220 = vector.broadcast %cst_87 : f32 to vector<8x128xf32>
    %221 = arith.mulf %220, %219 : vector<8x128xf32>
    %222 = vector.extract_strided_slice %205 {offsets = [0, 256], sizes = [8, 128], strides = [1, 1]} : vector<8x512xf32> to vector<8x128xf32>
    %223 = math.tanh %222 : vector<8x128xf32>
    %224 = vector.extract_strided_slice %205 {offsets = [0, 384], sizes = [8, 128], strides = [1, 1]} : vector<8x512xf32> to vector<8x128xf32>
    %cst_88 = arith.constant 5.000000e-01 : f32
    %225 = vector.broadcast %cst_88 : f32 to vector<8x128xf32>
    %226 = arith.mulf %225, %224 : vector<8x128xf32>
    %227 = math.tanh %226 : vector<8x128xf32>
    %cst_89 = arith.constant 1.000000e+00 : f32
    %228 = vector.broadcast %cst_89 : f32 to vector<8x128xf32>
    %229 = arith.addf %228, %227 : vector<8x128xf32>
    %cst_90 = arith.constant 5.000000e-01 : f32
    %230 = vector.broadcast %cst_90 : f32 to vector<8x128xf32>
    %231 = arith.mulf %230, %229 : vector<8x128xf32>
    %232 = arith.mulf %221, %196 : vector<8x128xf32>
    %233 = arith.mulf %213, %223 : vector<8x128xf32>
    %234 = arith.addf %232, %233 : vector<8x128xf32>
    %235 = math.tanh %234 : vector<8x128xf32>
    %236 = arith.mulf %231, %235 : vector<8x128xf32>
    %c6_i32 = arith.constant 6 : i32
    %c8_i32_91 = arith.constant 8 : i32
    %237 = arith.muli %c6_i32, %c8_i32_91 : i32
    %238 = tpu.assume_multiple %237, 8 : i32
    %239 = arith.index_cast %238 : i32 to index
    %c0_92 = arith.constant 0 : index
    %240 = vector.load %arg6[%239, %c0_92] : memref<64x512xf32, #tpu.memory_space<vmem>>, vector<8x512xf32>
    %c0_93 = arith.constant 0 : index
    %c0_94 = arith.constant 0 : index
    %241 = vector.load %arg2[%c0_93, %c0_94] : memref<128x512xf32, #tpu.memory_space<vmem>>, vector<128x512xf32>
    %cst_95 = arith.constant dense<0.000000e+00> : vector<8x512xf32>
    %242 = tpu.matmul %236, %241, %cst_95 {dimension_numbers = #tpu.dot_dimension_numbers<[1], [0], [0], [1], [0, 0, 1, 1], [], []>} : vector<8x128xf32>, vector<128x512xf32>, vector<8x512xf32> -> vector<8x512xf32>
    %243 = arith.addf %240, %242 : vector<8x512xf32>
    %244 = vector.extract_strided_slice %243 {offsets = [0, 0], sizes = [8, 128], strides = [1, 1]} : vector<8x512xf32> to vector<8x128xf32>
    %cst_96 = arith.constant 5.000000e-01 : f32
    %245 = vector.broadcast %cst_96 : f32 to vector<8x128xf32>
    %246 = arith.mulf %245, %244 : vector<8x128xf32>
    %247 = math.tanh %246 : vector<8x128xf32>
    %cst_97 = arith.constant 1.000000e+00 : f32
    %248 = vector.broadcast %cst_97 : f32 to vector<8x128xf32>
    %249 = arith.addf %248, %247 : vector<8x128xf32>
    %cst_98 = arith.constant 5.000000e-01 : f32
    %250 = vector.broadcast %cst_98 : f32 to vector<8x128xf32>
    %251 = arith.mulf %250, %249 : vector<8x128xf32>
    %252 = vector.extract_strided_slice %243 {offsets = [0, 128], sizes = [8, 128], strides = [1, 1]} : vector<8x512xf32> to vector<8x128xf32>
    %cst_99 = arith.constant 5.000000e-01 : f32
    %253 = vector.broadcast %cst_99 : f32 to vector<8x128xf32>
    %254 = arith.mulf %253, %252 : vector<8x128xf32>
    %255 = math.tanh %254 : vector<8x128xf32>
    %cst_100 = arith.constant 1.000000e+00 : f32
    %256 = vector.broadcast %cst_100 : f32 to vector<8x128xf32>
    %257 = arith.addf %256, %255 : vector<8x128xf32>
    %cst_101 = arith.constant 5.000000e-01 : f32
    %258 = vector.broadcast %cst_101 : f32 to vector<8x128xf32>
    %259 = arith.mulf %258, %257 : vector<8x128xf32>
    %260 = vector.extract_strided_slice %243 {offsets = [0, 256], sizes = [8, 128], strides = [1, 1]} : vector<8x512xf32> to vector<8x128xf32>
    %261 = math.tanh %260 : vector<8x128xf32>
    %262 = vector.extract_strided_slice %243 {offsets = [0, 384], sizes = [8, 128], strides = [1, 1]} : vector<8x512xf32> to vector<8x128xf32>
    %cst_102 = arith.constant 5.000000e-01 : f32
    %263 = vector.broadcast %cst_102 : f32 to vector<8x128xf32>
    %264 = arith.mulf %263, %262 : vector<8x128xf32>
    %265 = math.tanh %264 : vector<8x128xf32>
    %cst_103 = arith.constant 1.000000e+00 : f32
    %266 = vector.broadcast %cst_103 : f32 to vector<8x128xf32>
    %267 = arith.addf %266, %265 : vector<8x128xf32>
    %cst_104 = arith.constant 5.000000e-01 : f32
    %268 = vector.broadcast %cst_104 : f32 to vector<8x128xf32>
    %269 = arith.mulf %268, %267 : vector<8x128xf32>
    %270 = arith.mulf %259, %234 : vector<8x128xf32>
    %271 = arith.mulf %251, %261 : vector<8x128xf32>
    %272 = arith.addf %270, %271 : vector<8x128xf32>
    %273 = math.tanh %272 : vector<8x128xf32>
    %274 = arith.mulf %269, %273 : vector<8x128xf32>
    %c7_i32 = arith.constant 7 : i32
    %c8_i32_105 = arith.constant 8 : i32
    %275 = arith.muli %c7_i32, %c8_i32_105 : i32
    %276 = tpu.assume_multiple %275, 8 : i32
    %277 = arith.index_cast %276 : i32 to index
    %c0_106 = arith.constant 0 : index
    %278 = vector.load %arg6[%277, %c0_106] : memref<64x512xf32, #tpu.memory_space<vmem>>, vector<8x512xf32>
    %c0_107 = arith.constant 0 : index
    %c0_108 = arith.constant 0 : index
    %279 = vector.load %arg2[%c0_107, %c0_108] : memref<128x512xf32, #tpu.memory_space<vmem>>, vector<128x512xf32>
    %cst_109 = arith.constant dense<0.000000e+00> : vector<8x512xf32>
    %280 = tpu.matmul %274, %279, %cst_109 {dimension_numbers = #tpu.dot_dimension_numbers<[1], [0], [0], [1], [0, 0, 1, 1], [], []>} : vector<8x128xf32>, vector<128x512xf32>, vector<8x512xf32> -> vector<8x512xf32>
    %281 = arith.addf %278, %280 : vector<8x512xf32>
    %282 = vector.extract_strided_slice %281 {offsets = [0, 0], sizes = [8, 128], strides = [1, 1]} : vector<8x512xf32> to vector<8x128xf32>
    %cst_110 = arith.constant 5.000000e-01 : f32
    %283 = vector.broadcast %cst_110 : f32 to vector<8x128xf32>
    %284 = arith.mulf %283, %282 : vector<8x128xf32>
    %285 = math.tanh %284 : vector<8x128xf32>
    %cst_111 = arith.constant 1.000000e+00 : f32
    %286 = vector.broadcast %cst_111 : f32 to vector<8x128xf32>
    %287 = arith.addf %286, %285 : vector<8x128xf32>
    %cst_112 = arith.constant 5.000000e-01 : f32
    %288 = vector.broadcast %cst_112 : f32 to vector<8x128xf32>
    %289 = arith.mulf %288, %287 : vector<8x128xf32>
    %290 = vector.extract_strided_slice %281 {offsets = [0, 128], sizes = [8, 128], strides = [1, 1]} : vector<8x512xf32> to vector<8x128xf32>
    %cst_113 = arith.constant 5.000000e-01 : f32
    %291 = vector.broadcast %cst_113 : f32 to vector<8x128xf32>
    %292 = arith.mulf %291, %290 : vector<8x128xf32>
    %293 = math.tanh %292 : vector<8x128xf32>
    %cst_114 = arith.constant 1.000000e+00 : f32
    %294 = vector.broadcast %cst_114 : f32 to vector<8x128xf32>
    %295 = arith.addf %294, %293 : vector<8x128xf32>
    %cst_115 = arith.constant 5.000000e-01 : f32
    %296 = vector.broadcast %cst_115 : f32 to vector<8x128xf32>
    %297 = arith.mulf %296, %295 : vector<8x128xf32>
    %298 = vector.extract_strided_slice %281 {offsets = [0, 256], sizes = [8, 128], strides = [1, 1]} : vector<8x512xf32> to vector<8x128xf32>
    %299 = math.tanh %298 : vector<8x128xf32>
    %300 = vector.extract_strided_slice %281 {offsets = [0, 384], sizes = [8, 128], strides = [1, 1]} : vector<8x512xf32> to vector<8x128xf32>
    %cst_116 = arith.constant 5.000000e-01 : f32
    %301 = vector.broadcast %cst_116 : f32 to vector<8x128xf32>
    %302 = arith.mulf %301, %300 : vector<8x128xf32>
    %303 = math.tanh %302 : vector<8x128xf32>
    %cst_117 = arith.constant 1.000000e+00 : f32
    %304 = vector.broadcast %cst_117 : f32 to vector<8x128xf32>
    %305 = arith.addf %304, %303 : vector<8x128xf32>
    %cst_118 = arith.constant 5.000000e-01 : f32
    %306 = vector.broadcast %cst_118 : f32 to vector<8x128xf32>
    %307 = arith.mulf %306, %305 : vector<8x128xf32>
    %308 = arith.mulf %297, %272 : vector<8x128xf32>
    %309 = arith.mulf %289, %299 : vector<8x128xf32>
    %310 = arith.addf %308, %309 : vector<8x128xf32>
    %311 = math.tanh %310 : vector<8x128xf32>
    %312 = arith.mulf %307, %311 : vector<8x128xf32>
    %c8_i32_119 = arith.constant 8 : i32
    %c0_120 = arith.constant 0 : index
    %c0_121 = arith.constant 0 : index
    %313 = vector.load %arg3[%c0_120, %c0_121] : memref<258x128xf32, #tpu.memory_space<vmem>>, vector<128x128xf32>
    %c128 = arith.constant 128 : index
    %c0_122 = arith.constant 0 : index
    %314 = vector.load %arg3[%c128, %c0_122] : memref<258x128xf32, #tpu.memory_space<vmem>>, vector<128x128xf32>
    %c256 = arith.constant 256 : index
    %c0_123 = arith.constant 0 : index
    %315 = vector.load %arg3[%c256, %c0_123] : memref<258x128xf32, #tpu.memory_space<vmem>>, vector<1x128xf32>
    %c257 = arith.constant 257 : index
    %c0_124 = arith.constant 0 : index
    %316 = vector.load %arg3[%c257, %c0_124] : memref<258x128xf32, #tpu.memory_space<vmem>>, vector<1x128xf32>
    %cst_125 = arith.constant dense<0.000000e+00> : vector<8x128xf32>
    %317 = tpu.matmul %312, %313, %cst_125 {dimension_numbers = #tpu.dot_dimension_numbers<[1], [0], [0], [1], [0, 0, 1, 1], [], []>} : vector<8x128xf32>, vector<128x128xf32>, vector<8x128xf32> -> vector<8x128xf32>
    %318 = vector.broadcast %315 : vector<1x128xf32> to vector<8x128xf32>
    %319 = arith.addf %317, %318 : vector<8x128xf32>
    %cst_126 = arith.constant 5.000000e-01 : f32
    %320 = vector.broadcast %cst_126 : f32 to vector<8x128xf32>
    %321 = arith.mulf %320, %319 : vector<8x128xf32>
    %322 = math.tanh %321 : vector<8x128xf32>
    %cst_127 = arith.constant 1.000000e+00 : f32
    %323 = vector.broadcast %cst_127 : f32 to vector<8x128xf32>
    %324 = arith.addf %323, %322 : vector<8x128xf32>
    %cst_128 = arith.constant 5.000000e-01 : f32
    %325 = vector.broadcast %cst_128 : f32 to vector<8x128xf32>
    %326 = arith.mulf %325, %324 : vector<8x128xf32>
    %cst_129 = arith.constant dense<0.000000e+00> : vector<8x128xf32>
    %327 = tpu.matmul %326, %314, %cst_129 {dimension_numbers = #tpu.dot_dimension_numbers<[1], [0], [0], [1], [0, 0, 1, 1], [], []>} : vector<8x128xf32>, vector<128x128xf32>, vector<8x128xf32> -> vector<8x128xf32>
    %328 = vector.broadcast %316 : vector<1x128xf32> to vector<8x128xf32>
    %329 = arith.addf %327, %328 : vector<8x128xf32>
    %c0_130 = arith.constant 0 : index
    %c0_131 = arith.constant 0 : index
    %330 = vector.load %arg4[%c0_130, %c0_131] : memref<8x128xf32, #tpu.memory_space<vmem>>, vector<8x128xf32>
    tpu.vector_store %arg4[%c0_130, %c0_131], %329 {strides = array<i32>} : memref<8x128xf32, #tpu.memory_space<vmem>>, vector<8x128xf32>,
    %c0_132 = arith.constant 0 : index
    %c0_133 = arith.constant 0 : index
    %331 = vector.load %arg5[%c0_132, %c0_133] : memref<8x128xf32, #tpu.memory_space<vmem>>, vector<8x128xf32>
    tpu.vector_store %arg5[%c0_132, %c0_133], %312 {strides = array<i32>} : memref<8x128xf32, #tpu.memory_space<vmem>>, vector<8x128xf32>,
    return
  }
}

</mosaic_0001>

<llo_original>
// kernel: simple_lstm_forward.1
$region0: #{simple_lstm_forward.1}
  #allocation0 [shape = 'u32[]', space=smem, size = 0x4, offset = 0x4, fixed_abs, tag = 'smem constant byte address 0x4 - core index']
  #allocation1 [shape = 'u32[144,128]{1,0:T(1,128)}', space=vmem, size = 0x12000, scoped, tag = 'internal scratch']
  #allocation2 [shape = 'f32[64,512]{1,0:T(8,128)}', space=vmem, size = 0x20000, scoped, tag = 'scratch operand']
  %s0 = inlined_call_operand.hbm [shape: f32[64,10], index: 0, kind: input, shape index: {}]
  %s1 = inlined_call_operand.hbm [shape: f32[11,512], index: 1, kind: input, shape index: {}]
  %s2 = inlined_call_operand.hbm [shape: f32[128,512], index: 2, kind: input, shape index: {}]
  %s3 = inlined_call_operand.hbm [shape: f32[258,128], index: 3, kind: input, shape index: {}]
  %s4 = inlined_call_operand.vmem [shape: f32[8,128], index: 4, kind: output, shape index: {0}]
  %s5 = inlined_call_operand.hbm [shape: f32[8,128], index: 5, kind: output, shape index: {1}]
  %6 = xla_tuple %s4, %s5
  %s7 = sld [smem:[#allocation0]]
  $region50: #{simple_lstm_forward.1} parent=0
    _
  %s9 = ssub.s32 1, %s7
  %s10 = scalar_select 0, %s9, %s7
  $region1: #{simple_lstm_forward.1} parent=0
    #allocation3 [shape = 'u8[32768]{0}', space=vmem, size = 0x8000, scoped, tag = 'input window, operand 0, single buffered']
    #allocation4 [shape = 's32[1]{0}', space=sflag, size = 0x4, scoped, tag = 'scoped memory for simple_lstm_forward.1']
    #allocation5 [shape = 's32[1]{0}', space=sflag, size = 0x4, scoped, tag = 'scoped memory for simple_lstm_forward.1']
    #allocation6 [shape = 'u8[32768]{0}', space=vmem, size = 0x8000, scoped, tag = 'input window, operand 1, single buffered']
    #allocation7 [shape = 's32[1]{0}', space=sflag, size = 0x4, scoped, tag = 'scoped memory for simple_lstm_forward.1']
    #allocation8 [shape = 'u8[262144]{0}', space=vmem, size = 0x40000, scoped, tag = 'input window, operand 2, single buffered']
    #allocation9 [shape = 'u8[135168]{0}', space=vmem, size = 0x21000, scoped, tag = 'input window, operand 3, single buffered']
    #allocation10 [shape = 's32[1]{0}', space=sflag, size = 0x4, scoped, tag = 'scoped memory for simple_lstm_forward.1']
    #allocation11 [shape = 'u8[4096]{0}', space=vmem, size = 0x1000, scoped, tag = 'output window, operand 1, single buffered']
    %11 = vsyncpa [#allocation4], 0
    %12 = vsyncpa [#allocation7], 0
    %13 = vsyncpa [#allocation10], 0
    %14 = vsyncpa [#allocation5], 0
    // Predicated region
    $region2: #{simple_lstm_forward.1} parent=1 // pred_check
      _
    $region3: #{simple_lstm_forward.1} parent=1 // pred_check_branch
      %16 = sbr.rel (0) target = $region5
    $region4: #{simple_lstm_forward.1} parent=1 // pred_region
      %s18 = ssub.s32 1024, 1024
      %19 = vsyncadd [#allocation4], %s18
      %s20 = sshll.u32 [#allocation3], 4
      %s21 = int_to_ptr.vmem [resolvable:$true] %s20
      %26 = dma.hbm_to_vmem [thread:$0]  %s0, 1024, %s21, [#allocation4], 128, 128, 8
    $region5: #{simple_lstm_forward.1} parent=1 // pred_fallthru
      _
    // Predicated region
    $region6: #{simple_lstm_forward.1} parent=1 // pred_check
      _
    $region7: #{simple_lstm_forward.1} parent=1 // pred_check_branch
      %28 = sbr.rel (0) target = $region9
    $region8: #{simple_lstm_forward.1} parent=1 // pred_region
      %s30 = ssub.s32 1024, 1024
      %31 = vsyncadd [#allocation7], %s30
      %s32 = sshll.u32 [#allocation6], 4
      %s33 = int_to_ptr.vmem [resolvable:$true] %s32
      %38 = dma.hbm_to_vmem [thread:$0]  %s1, 1024, %s33, [#allocation7], 512, 512, 32
    $region9: #{simple_lstm_forward.1} parent=1 // pred_fallthru
      _
    // Predicated region
    $region10: #{simple_lstm_forward.1} parent=1 // pred_check
      _
    $region11: #{simple_lstm_forward.1} parent=1 // pred_check_branch
      %40 = sbr.rel (0) target = $region13
    $region12: #{simple_lstm_forward.1} parent=1 // pred_region
      %s42 = ssub.s32 8192, 8192
      %43 = vsyncadd [#allocation7], %s42
      %s44 = sshll.u32 [#allocation8], 4
      %s45 = int_to_ptr.vmem [resolvable:$true] %s44
      %50 = dma.hbm_to_vmem [thread:$0]  %s2, 8192, %s45, [#allocation7], 512, 512, 32
    $region13: #{simple_lstm_forward.1} parent=1 // pred_fallthru
      _
    // Predicated region
    $region14: #{simple_lstm_forward.1} parent=1 // pred_check
      _
    $region15: #{simple_lstm_forward.1} parent=1 // pred_check_branch
      %52 = sbr.rel (0) target = $region17
    $region16: #{simple_lstm_forward.1} parent=1 // pred_region
      %s54 = ssub.s32 4224, 4224
      %55 = vsyncadd [#allocation10], %s54
      %s56 = sshll.u32 [#allocation9], 4
      %s57 = int_to_ptr.vmem [resolvable:$true] %s56
      %62 = dma.hbm_to_vmem [thread:$0]  %s3, 4224, %s57, [#allocation10], 128, 128, 8
    $region17: #{simple_lstm_forward.1} parent=1 // pred_fallthru
      _
    // Predicated region
    $region18: #{simple_lstm_forward.1} parent=1 // pred_check
      _
    $region19: #{simple_lstm_forward.1} parent=1 // pred_check_branch
      %64 = sbr.rel (0) target = $region21
    $region20: #{simple_lstm_forward.1} parent=1 // pred_region
      %65 = dma.done [#allocation4], 1024
    $region21: #{simple_lstm_forward.1} parent=1 // pred_fallthru
      _
    // Predicated region
    $region22: #{simple_lstm_forward.1} parent=1 // pred_check
      _
    $region23: #{simple_lstm_forward.1} parent=1 // pred_check_branch
      %67 = sbr.rel (0) target = $region25
    $region24: #{simple_lstm_forward.1} parent=1 // pred_region
      %68 = dma.done [#allocation7], 1024
    $region25: #{simple_lstm_forward.1} parent=1 // pred_fallthru
      _
    // Predicated region
    $region26: #{simple_lstm_forward.1} parent=1 // pred_check
      _
    $region27: #{simple_lstm_forward.1} parent=1 // pred_check_branch
      %70 = sbr.rel (0) target = $region29
    $region28: #{simple_lstm_forward.1} parent=1 // pred_region
      %71 = dma.done [#allocation7], 8192
    $region29: #{simple_lstm_forward.1} parent=1 // pred_fallthru
      _
    // Predicated region
    $region30: #{simple_lstm_forward.1} parent=1 // pred_check
      _
    $region31: #{simple_lstm_forward.1} parent=1 // pred_check_branch
      %73 = sbr.rel (0) target = $region33
    $region32: #{simple_lstm_forward.1} parent=1 // pred_region
      %74 = dma.done [#allocation10], 4224
    $region33: #{simple_lstm_forward.1} parent=1 // pred_fallthru
      _
    %v75 = vld [vmem:[#allocation3] sm:$0xff]
    %v76 = vld [vmem:[#allocation3 + $0x8] sm:$0xff]
    %v77 = vld [vmem:[#allocation3 + $0x10] sm:$0xff]
    %v78 = vld [vmem:[#allocation3 + $0x18] sm:$0xff]
    %v79 = vld [vmem:[#allocation3 + $0x20] sm:$0xff]
    %v80 = vld [vmem:[#allocation3 + $0x28] sm:$0xff]
    %v81 = vld [vmem:[#allocation3 + $0x30] sm:$0xff]
    %v82 = vld [vmem:[#allocation3 + $0x38] sm:$0xff]
    %v83 = vld [vmem:[#allocation6] sm:$0xff]
    %v84 = vld [vmem:[#allocation6 + $0x8] sm:$0xff]
    %v85 = vld [vmem:[#allocation6 + $0x10] sm:$0xff]
    %v86 = vld [vmem:[#allocation6 + $0x18] sm:$0xff]
    %v87 = vld [vmem:[#allocation6 + $0x20] sm:$0x3]
    %v88 = vld [vmem:[#allocation6 + $0x28] sm:$0x3]
    %v89 = vld [vmem:[#allocation6 + $0x30] sm:$0x3]
    %v90 = vld [vmem:[#allocation6 + $0x38] sm:$0x3]
    %s91 = scalar_lea.vmem [#allocation6], 34
    %v92 = vld [vmem:[%s91] ss:$8 sm:$0xf]
    %v94 = vlaneseq
    %v95 = vshrl.u32 %v94, 7
    %v96 = vsub.s32 0, %v95
    %v97 = vrot.slane %v92, %v96
    %v98 = vlaneseq
    %v99 = vshrl.u32 %v98, 7
    %v100 = vsub.s32 1, %v99
    %v101 = vrot.slane %v92, %v100
    %v102 = vlaneseq
    %v103 = vshrl.u32 %v102, 7
    %v104 = vsub.s32 2, %v103
    %v105 = vrot.slane %v92, %v104
    %v106 = vlaneseq
    %v107 = vshrl.u32 %v106, 7
    %v108 = vsub.s32 3, %v107
    %v109 = vrot.slane %v92, %v108
    %vm114 = vcmask 80896
    %v116 = vsel %vm114, %v75, 0
    %v119 = vsel %vm114, %v76, 0
    %v122 = vsel %vm114, %v77, 0
    %v125 = vsel %vm114, %v78, 0
    %v128 = vsel %vm114, %v79, 0
    %v131 = vsel %vm114, %v80, 0
    %v134 = vsel %vm114, %v81, 0
    %v137 = vsel %vm114, %v82, 0
    %vm139 = vcmask 1041408
    %v141 = vsel %vm139, %v87, 0
    %v144 = vsel %vm139, %v88, 0
    %v147 = vsel %vm139, %v89, 0
    %v150 = vsel %vm139, %v90, 0
    %152 = vmatprep.subr.mxu0 %v84
    %153 = vmatpush1.msra.mxu0 %v83
    %154 = vmatprep.subr.mxu0 %v144
    %155 = vmatpush1.msra.mxu0 %v141
    %156 = vmatprep.subr.mxu0 0.0
    %157 = vmatpush1.msra.mxu0 0.0
    %158 = vmatprep.subr.mxu0 0.0
    %159 = vmatpush1.msra.mxu0 0.0
    %160 = vmatprep.subr.mxu0 0.0
    %161 = vmatpush1.msra.mxu0 0.0
    %162 = vmatprep.subr.mxu0 0.0
    %163 = vmatpush1.msra.mxu0 0.0
    %164 = vmatprep.subr.mxu0 0.0
    %165 = vmatpush1.msra.mxu0 0.0
    %166 = vmatprep.subr.mxu0 0.0
    %167 = vmatpush1.msra.mxu0 0.0
    %168 = vmatprep.subr.mxu0 0.0
    %169 = vmatpush1.msra.mxu0 0.0
    %170 = vmatprep.subr.mxu0 0.0
    %171 = vmatpush1.msra.mxu0 0.0
    %172 = vmatprep.subr.mxu0 0.0
    %173 = vmatpush1.msra.mxu0 0.0
    %174 = vmatprep.subr.mxu0 0.0
    %175 = vmatpush1.msra.mxu0 0.0
    %176 = vmatprep.subr.mxu0 0.0
    %177 = vmatpush1.msra.mxu0 0.0
    %178 = vmatprep.subr.mxu0 0.0
    %179 = vmatpush1.msra.mxu0 0.0
    %180 = vmatprep.subr.mxu0 0.0
    %181 = vmatpush1.msra.mxu0 0.0
    %182 = vmatprep.subr.mxu0 0.0
    %183 = vmatpush1.msra.mxu0 0.0
    %184 = vmatprep.subr.mxu0 0.0
    %185 = vmatpush1.msra.mxu0 0.0
    %186 = vmatprep.subr.mxu0 0.0
    %187 = vmatpush1.msra.mxu0 0.0
    %188 = vmatprep.subr.mxu0 0.0
    %189 = vmatpush1.msra.mxu0 0.0
    %190 = vmatprep.subr.mxu0 0.0
    %191 = vmatpush1.msra.mxu0 0.0
    %192 = vmatprep.subr.mxu0 0.0
    %193 = vmatpush1.msra.mxu0 0.0
    %194 = vmatprep.subr.mxu0 0.0
    %195 = vmatpush1.msra.mxu0 0.0
    %196 = vmatprep.subr.mxu0 0.0
    %197 = vmatpush1.msra.mxu0 0.0
    %198 = vmatprep.subr.mxu0 0.0
    %199 = vmatpush1.msra.mxu0 0.0
    %200 = vmatprep.subr.mxu0 0.0
    %201 = vmatpush1.msra.mxu0 0.0
    %202 = vmatprep.subr.mxu0 0.0
    %203 = vmatpush1.msra.mxu0 0.0
    %204 = vmatprep.subr.mxu0 0.0
    %205 = vmatpush1.msra.mxu0 0.0
    %206 = vmatprep.subr.mxu0 0.0
    %207 = vmatpush1.msra.mxu0 0.0
    %208 = vmatprep.subr.mxu0 0.0
    %209 = vmatpush1.msra.mxu0 0.0
    %210 = vmatprep.subr.mxu0 0.0
    %211 = vmatpush1.msra.mxu0 0.0
    %212 = vmatprep.subr.mxu0 0.0
    %213 = vmatpush1.msra.mxu0 0.0
    %214 = vmatprep.subr.mxu0 0.0
    %215 = vmatpush1.msra.mxu0 0.0
    %216 = vmatprep.mubr.f32.mxu0 0.0
    %217 = vmatmul.mubr.f32.gmra.mrb[0].mxu0 %v116
    %v218 = vpop.f32.mrb[0].mxu0
    %v219 = vadd.f32 %v97, %v218
    %v220 = vpop.f32.mrb[0].mxu0
    %v221 = vadd.f32 %v101, %v220
    %222 = vmatprep.mubr.f32.mxu0 0.0
    %223 = vmatmul.mubr.f32.gmra.mrb[0].mxu0 %v119
    %v224 = vpop.f32.mrb[0].mxu0
    %v225 = vadd.f32 %v97, %v224
    %v226 = vpop.f32.mrb[0].mxu0
    %v227 = vadd.f32 %v101, %v226
    %228 = vmatprep.mubr.f32.mxu0 0.0
    %229 = vmatmul.mubr.f32.gmra.mrb[0].mxu0 %v122
    %v230 = vpop.f32.mrb[0].mxu0
    %v231 = vadd.f32 %v97, %v230
    %v232 = vpop.f32.mrb[0].mxu0
    %v233 = vadd.f32 %v101, %v232
    %234 = vmatprep.mubr.f32.mxu0 0.0
    %235 = vmatmul.mubr.f32.gmra.mrb[0].mxu0 %v125
    %v236 = vpop.f32.mrb[0].mxu0
    %v237 = vadd.f32 %v97, %v236
    %v238 = vpop.f32.mrb[0].mxu0
    %v239 = vadd.f32 %v101, %v238
    %240 = vmatprep.mubr.f32.mxu0 0.0
    %241 = vmatmul.mubr.f32.gmra.mrb[0].mxu0 %v128
    %v242 = vpop.f32.mrb[0].mxu0
    %v243 = vadd.f32 %v97, %v242
    %v244 = vpop.f32.mrb[0].mxu0
    %v245 = vadd.f32 %v101, %v244
    %246 = vmatprep.mubr.f32.mxu0 0.0
    %247 = vmatmul.mubr.f32.gmra.mrb[0].mxu0 %v131
    %v248 = vpop.f32.mrb[0].mxu0
    %v249 = vadd.f32 %v97, %v248
    %v250 = vpop.f32.mrb[0].mxu0
    %v251 = vadd.f32 %v101, %v250
    %252 = vmatprep.mubr.f32.mxu0 0.0
    %253 = vmatmul.mubr.f32.gmra.mrb[0].mxu0 %v134
    %v254 = vpop.f32.mrb[0].mxu0
    %v255 = vadd.f32 %v97, %v254
    %v256 = vpop.f32.mrb[0].mxu0
    %v257 = vadd.f32 %v101, %v256
    %258 = vmatprep.mubr.f32.mxu0 0.0
    %259 = vmatmul.mubr.f32.gmra.mrb[0].mxu0 %v137
    %v260 = vpop.f32.mrb[0].mxu0
    %v261 = vadd.f32 %v97, %v260
    %v262 = vpop.f32.mrb[0].mxu0
    %v263 = vadd.f32 %v101, %v262
    %264 = vdwg.mxu0
    %265 = vmatprep.subr.mxu0 %v86
    %266 = vmatpush1.msra.mxu0 %v85
    %267 = vmatprep.subr.mxu0 %v150
    %268 = vmatpush1.msra.mxu0 %v147
    %269 = vmatprep.subr.mxu0 0.0
    %270 = vmatpush1.msra.mxu0 0.0
    %271 = vmatprep.subr.mxu0 0.0
    %272 = vmatpush1.msra.mxu0 0.0
    %273 = vmatprep.subr.mxu0 0.0
    %274 = vmatpush1.msra.mxu0 0.0
    %275 = vmatprep.subr.mxu0 0.0
    %276 = vmatpush1.msra.mxu0 0.0
    %277 = vmatprep.subr.mxu0 0.0
    %278 = vmatpush1.msra.mxu0 0.0
    %279 = vmatprep.subr.mxu0 0.0
    %280 = vmatpush1.msra.mxu0 0.0
    %281 = vmatprep.subr.mxu0 0.0
    %282 = vmatpush1.msra.mxu0 0.0
    %283 = vmatprep.subr.mxu0 0.0
    %284 = vmatpush1.msra.mxu0 0.0
    %285 = vmatprep.subr.mxu0 0.0
    %286 = vmatpush1.msra.mxu0 0.0
    %287 = vmatprep.subr.mxu0 0.0
    %288 = vmatpush1.msra.mxu0 0.0
    %289 = vmatprep.subr.mxu0 0.0
    %290 = vmatpush1.msra.mxu0 0.0
    %291 = vmatprep.subr.mxu0 0.0
    %292 = vmatpush1.msra.mxu0 0.0
    %293 = vmatprep.subr.mxu0 0.0
    %294 = vmatpush1.msra.mxu0 0.0
    %295 = vmatprep.subr.mxu0 0.0
    %296 = vmatpush1.msra.mxu0 0.0
    %297 = vmatprep.subr.mxu0 0.0
    %298 = vmatpush1.msra.mxu0 0.0
    %299 = vmatprep.subr.mxu0 0.0
    %300 = vmatpush1.msra.mxu0 0.0
    %301 = vmatprep.subr.mxu0 0.0
    %302 = vmatpush1.msra.mxu0 0.0
    %303 = vmatprep.subr.mxu0 0.0
    %304 = vmatpush1.msra.mxu0 0.0
    %305 = vmatprep.subr.mxu0 0.0
    %306 = vmatpush1.msra.mxu0 0.0
    %307 = vmatprep.subr.mxu0 0.0
    %308 = vmatpush1.msra.mxu0 0.0
    %309 = vmatprep.subr.mxu0 0.0
    %310 = vmatpush1.msra.mxu0 0.0
    %311 = vmatprep.subr.mxu0 0.0
    %312 = vmatpush1.msra.mxu0 0.0
    %313 = vmatprep.subr.mxu0 0.0
    %314 = vmatpush1.msra.mxu0 0.0
    %315 = vmatprep.subr.mxu0 0.0
    %316 = vmatpush1.msra.mxu0 0.0
    %317 = vmatprep.subr.mxu0 0.0
    %318 = vmatpush1.msra.mxu0 0.0
    %319 = vmatprep.subr.mxu0 0.0
    %320 = vmatpush1.msra.mxu0 0.0
    %321 = vmatprep.subr.mxu0 0.0
    %322 = vmatpush1.msra.mxu0 0.0
    %323 = vmatprep.subr.mxu0 0.0
    %324 = vmatpush1.msra.mxu0 0.0
    %325 = vmatprep.subr.mxu0 0.0
    %326 = vmatpush1.msra.mxu0 0.0
    %327 = vmatprep.subr.mxu0 0.0
    %328 = vmatpush1.msra.mxu0 0.0
    %329 = vmatprep.mubr.f32.mxu0 0.0
    %330 = vmatmul.mubr.f32.gmra.mrb[0].mxu0 %v116
    %v331 = vpop.f32.mrb[0].mxu0
    %v332 = vadd.f32 %v105, %v331
    %v333 = vpop.f32.mrb[0].mxu0
    %v334 = vadd.f32 %v109, %v333
    %335 = vmatprep.mubr.f32.mxu0 0.0
    %336 = vmatmul.mubr.f32.gmra.mrb[0].mxu0 %v119
    %v337 = vpop.f32.mrb[0].mxu0
    %v338 = vadd.f32 %v105, %v337
    %v339 = vpop.f32.mrb[0].mxu0
    %v340 = vadd.f32 %v109, %v339
    %341 = vmatprep.mubr.f32.mxu0 0.0
    %342 = vmatmul.mubr.f32.gmra.mrb[0].mxu0 %v122
    %v343 = vpop.f32.mrb[0].mxu0
    %v344 = vadd.f32 %v105, %v343
    %v345 = vpop.f32.mrb[0].mxu0
    %v346 = vadd.f32 %v109, %v345
    %347 = vmatprep.mubr.f32.mxu0 0.0
    %348 = vmatmul.mubr.f32.gmra.mrb[0].mxu0 %v125
    %v349 = vpop.f32.mrb[0].mxu0
    %v350 = vadd.f32 %v105, %v349
    %v351 = vpop.f32.mrb[0].mxu0
    %v352 = vadd.f32 %v109, %v351
    %353 = vmatprep.mubr.f32.mxu0 0.0
    %354 = vmatmul.mubr.f32.gmra.mrb[0].mxu0 %v128
    %v355 = vpop.f32.mrb[0].mxu0
    %v356 = vadd.f32 %v105, %v355
    %v357 = vpop.f32.mrb[0].mxu0
    %v358 = vadd.f32 %v109, %v357
    %359 = vmatprep.mubr.f32.mxu0 0.0
    %360 = vmatmul.mubr.f32.gmra.mrb[0].mxu0 %v131
    %v361 = vpop.f32.mrb[0].mxu0
    %v362 = vadd.f32 %v105, %v361
    %v363 = vpop.f32.mrb[0].mxu0
    %v364 = vadd.f32 %v109, %v363
    %365 = vmatprep.mubr.f32.mxu0 0.0
    %366 = vmatmul.mubr.f32.gmra.mrb[0].mxu0 %v134
    %v367 = vpop.f32.mrb[0].mxu0
    %v368 = vadd.f32 %v105, %v367
    %v369 = vpop.f32.mrb[0].mxu0
    %v370 = vadd.f32 %v109, %v369
    %371 = vmatprep.mubr.f32.mxu0 0.0
    %372 = vmatmul.mubr.f32.gmra.mrb[0].mxu0 %v137
    %v373 = vpop.f32.mrb[0].mxu0
    %v374 = vadd.f32 %v105, %v373
    %v375 = vpop.f32.mrb[0].mxu0
    %v376 = vadd.f32 %v109, %v375
    %377 = vdwg.mxu0
    %378 = vst [vmem:[#allocation2] sm:$0xff] %v219
    %379 = vst [vmem:[#allocation2 + $0x8] sm:$0xff] %v221
    %380 = vst [vmem:[#allocation2 + $0x10] sm:$0xff] %v332
    %381 = vst [vmem:[#allocation2 + $0x18] sm:$0xff] %v334
    %382 = vst [vmem:[#allocation2 + $0x20] sm:$0xff] %v225
    %383 = vst [vmem:[#allocation2 + $0x28] sm:$0xff] %v227
    %384 = vst [vmem:[#allocation2 + $0x30] sm:$0xff] %v338
    %385 = vst [vmem:[#allocation2 + $0x38] sm:$0xff] %v340
    %386 = vst [vmem:[#allocation2 + $0x40] sm:$0xff] %v231
    %387 = vst [vmem:[#allocation2 + $0x48] sm:$0xff] %v233
    %388 = vst [vmem:[#allocation2 + $0x50] sm:$0xff] %v344
    %389 = vst [vmem:[#allocation2 + $0x58] sm:$0xff] %v346
    %390 = vst [vmem:[#allocation2 + $0x60] sm:$0xff] %v237
    %391 = vst [vmem:[#allocation2 + $0x68] sm:$0xff] %v239
    %392 = vst [vmem:[#allocation2 + $0x70] sm:$0xff] %v350
    %393 = vst [vmem:[#allocation2 + $0x78] sm:$0xff] %v352
    %394 = vst [vmem:[#allocation2 + $0x80] sm:$0xff] %v243
    %395 = vst [vmem:[#allocation2 + $0x88] sm:$0xff] %v245
    %396 = vst [vmem:[#allocation2 + $0x90] sm:$0xff] %v356
    %397 = vst [vmem:[#allocation2 + $0x98] sm:$0xff] %v358
    %398 = vst [vmem:[#allocation2 + $0xa0] sm:$0xff] %v249
    %399 = vst [vmem:[#allocation2 + $0xa8] sm:$0xff] %v251
    %400 = vst [vmem:[#allocation2 + $0xb0] sm:$0xff] %v362
    %401 = vst [vmem:[#allocation2 + $0xb8] sm:$0xff] %v364
    %402 = vst [vmem:[#allocation2 + $0xc0] sm:$0xff] %v255
    %403 = vst [vmem:[#allocation2 + $0xc8] sm:$0xff] %v257
    %404 = vst [vmem:[#allocation2 + $0xd0] sm:$0xff] %v368
    %405 = vst [vmem:[#allocation2 + $0xd8] sm:$0xff] %v370
    %406 = vst [vmem:[#allocation2 + $0xe0] sm:$0xff] %v261
    %407 = vst [vmem:[#allocation2 + $0xe8] sm:$0xff] %v263
    %408 = vst [vmem:[#allocation2 + $0xf0] sm:$0xff] %v374
    %409 = vst [vmem:[#allocation2 + $0xf8] sm:$0xff] %v376
    %s410 = smul.u32 0, 4
    %s411 = smul.addr %s410, 8
    %s412 = scalar_lea.vmem [#allocation2], %s411
    %v413 = vld [vmem:[%s412] sm:$0xff]
    %v414 = vld [vmem:[%s412 + $0x8] sm:$0xff]
    %v415 = vld [vmem:[%s412 + $0x10] sm:$0xff]
    %v416 = vld [vmem:[%s412 + $0x18] sm:$0xff]
    %v417 = vld [vmem:[#allocation8] sm:$0xff]
    %v418 = vld [vmem:[#allocation8 + $0x8] sm:$0xff]
    %v419 = vld [vmem:[#allocation8 + $0x10] sm:$0xff]
    %v420 = vld [vmem:[#allocation8 + $0x18] sm:$0xff]
    %v421 = vld [vmem:[#allocation8 + $0x20] sm:$0xff]
    %v422 = vld [vmem:[#allocation8 + $0x28] sm:$0xff]
    %v423 = vld [vmem:[#allocation8 + $0x30] sm:$0xff]
    %v424 = vld [vmem:[#allocation8 + $0x38] sm:$0xff]
    %v425 = vld [vmem:[#allocation8 + $0x40] sm:$0xff]
    %v426 = vld [vmem:[#allocation8 + $0x48] sm:$0xff]
    %v427 = vld [vmem:[#allocation8 + $0x50] sm:$0xff]
    %v428 = vld [vmem:[#allocation8 + $0x58] sm:$0xff]
    %v429 = vld [vmem:[#allocation8 + $0x60] sm:$0xff]
    %v430 = vld [vmem:[#allocation8 + $0x68] sm:$0xff]
    %v431 = vld [vmem:[#allocation8 + $0x70] sm:$0xff]
    %v432 = vld [vmem:[#allocation8 + $0x78] sm:$0xff]
    %v433 = vld [vmem:[#allocation8 + $0x80] sm:$0xff]
    %v434 = vld [vmem:[#allocation8 + $0x88] sm:$0xff]
    %v435 = vld [vmem:[#allocation8 + $0x90] sm:$0xff]
    %v436 = vld [vmem:[#allocation8 + $0x98] sm:$0xff]
    %v437 = vld [vmem:[#allocation8 + $0xa0] sm:$0xff]
    %v438 = vld [vmem:[#allocation8 + $0xa8] sm:$0xff]
    %v439 = vld [vmem:[#allocation8 + $0xb0] sm:$0xff]
    %v440 = vld [vmem:[#allocation8 + $0xb8] sm:$0xff]
    %v441 = vld [vmem:[#allocation8 + $0xc0] sm:$0xff]
    %v442 = vld [vmem:[#allocation8 + $0xc8] sm:$0xff]
    %v443 = vld [vmem:[#allocation8 + $0xd0] sm:$0xff]
    %v444 = vld [vmem:[#allocation8 + $0xd8] sm:$0xff]
    %v445 = vld [vmem:[#allocation8 + $0xe0] sm:$0xff]
    %v446 = vld [vmem:[#allocation8 + $0xe8] sm:$0xff]
    %v447 = vld [vmem:[#allocation8 + $0xf0] sm:$0xff]
    %v448 = vld [vmem:[#allocation8 + $0xf8] sm:$0xff]
    %v449 = vld [vmem:[#allocation8 + $0x100] sm:$0xff]
    %v450 = vld [vmem:[#allocation8 + $0x108] sm:$0xff]
    %v451 = vld [vmem:[#allocation8 + $0x110] sm:$0xff]
    %v452 = vld [vmem:[#allocation8 + $0x118] sm:$0xff]
    %v453 = vld [vmem:[#allocation8 + $0x120] sm:$0xff]
    %v454 = vld [vmem:[#allocation8 + $0x128] sm:$0xff]
    %v455 = vld [vmem:[#allocation8 + $0x130] sm:$0xff]
    %v456 = vld [vmem:[#allocation8 + $0x138] sm:$0xff]
    %v457 = vld [vmem:[#allocation8 + $0x140] sm:$0xff]
    %v458 = vld [vmem:[#allocation8 + $0x148] sm:$0xff]
    %v459 = vld [vmem:[#allocation8 + $0x150] sm:$0xff]
    %v460 = vld [vmem:[#allocation8 + $0x158] sm:$0xff]
    %v461 = vld [vmem:[#allocation8 + $0x160] sm:$0xff]
    %v462 = vld [vmem:[#allocation8 + $0x168] sm:$0xff]
    %v463 = vld [vmem:[#allocation8 + $0x170] sm:$0xff]
    %v464 = vld [vmem:[#allocation8 + $0x178] sm:$0xff]
    %v465 = vld [vmem:[#allocation8 + $0x180] sm:$0xff]
    %v466 = vld [vmem:[#allocation8 + $0x188] sm:$0xff]
    %v467 = vld [vmem:[#allocation8 + $0x190] sm:$0xff]
    %v468 = vld [vmem:[#allocation8 + $0x198] sm:$0xff]
    %v469 = vld [vmem:[#allocation8 + $0x1a0] sm:$0xff]
    %v470 = vld [vmem:[#allocation8 + $0x1a8] sm:$0xff]
    %v471 = vld [vmem:[#allocation8 + $0x1b0] sm:$0xff]
    %v472 = vld [vmem:[#allocation8 + $0x1b8] sm:$0xff]
    %v473 = vld [vmem:[#allocation8 + $0x1c0] sm:$0xff]
    %v474 = vld [vmem:[#allocation8 + $0x1c8] sm:$0xff]
    %v475 = vld [vmem:[#allocation8 + $0x1d0] sm:$0xff]
    %v476 = vld [vmem:[#allocation8 + $0x1d8] sm:$0xff]
    %v477 = vld [vmem:[#allocation8 + $0x1e0] sm:$0xff]
    %v478 = vld [vmem:[#allocation8 + $0x1e8] sm:$0xff]
    %v479 = vld [vmem:[#allocation8 + $0x1f0] sm:$0xff]
    %v480 = vld [vmem:[#allocation8 + $0x1f8] sm:$0xff]
    %481 = vmatprep.subr.mxu0 %v418
    %482 = vmatpush1.msra.mxu0 %v417
    %483 = vmatprep.subr.mxu0 %v422
    %484 = vmatpush1.msra.mxu0 %v421
    %485 = vmatprep.subr.mxu0 %v426
    %486 = vmatpush1.msra.mxu0 %v425
    %487 = vmatprep.subr.mxu0 %v430
    %488 = vmatpush1.msra.mxu0 %v429
    %489 = vmatprep.subr.mxu0 %v434
    %490 = vmatpush1.msra.mxu0 %v433
    %491 = vmatprep.subr.mxu0 %v438
    %492 = vmatpush1.msra.mxu0 %v437
    %493 = vmatprep.subr.mxu0 %v442
    %494 = vmatpush1.msra.mxu0 %v441
    %495 = vmatprep.subr.mxu0 %v446
    %496 = vmatpush1.msra.mxu0 %v445
    %497 = vmatprep.subr.mxu0 %v450
    %498 = vmatpush1.msra.mxu0 %v449
    %499 = vmatprep.subr.mxu0 %v454
    %500 = vmatpush1.msra.mxu0 %v453
    %501 = vmatprep.subr.mxu0 %v458
    %502 = vmatpush1.msra.mxu0 %v457
    %503 = vmatprep.subr.mxu0 %v462
    %504 = vmatpush1.msra.mxu0 %v461
    %505 = vmatprep.subr.mxu0 %v466
    %506 = vmatpush1.msra.mxu0 %v465
    %507 = vmatprep.subr.mxu0 %v470
    %508 = vmatpush1.msra.mxu0 %v469
    %509 = vmatprep.subr.mxu0 %v474
    %510 = vmatpush1.msra.mxu0 %v473
    %511 = vmatprep.subr.mxu0 %v478
    %512 = vmatpush1.msra.mxu0 %v477
    %513 = vmatprep.subr.mxu0 0.0
    %514 = vmatpush1.msra.mxu0 0.0
    %515 = vmatprep.subr.mxu0 0.0
    %516 = vmatpush1.msra.mxu0 0.0
    %517 = vmatprep.subr.mxu0 0.0
    %518 = vmatpush1.msra.mxu0 0.0
    %519 = vmatprep.subr.mxu0 0.0
    %520 = vmatpush1.msra.mxu0 0.0
    %521 = vmatprep.subr.mxu0 0.0
    %522 = vmatpush1.msra.mxu0 0.0
    %523 = vmatprep.subr.mxu0 0.0
    %524 = vmatpush1.msra.mxu0 0.0
    %525 = vmatprep.subr.mxu0 0.0
    %526 = vmatpush1.msra.mxu0 0.0
    %527 = vmatprep.subr.mxu0 0.0
    %528 = vmatpush1.msra.mxu0 0.0
    %529 = vmatprep.subr.mxu0 0.0
    %530 = vmatpush1.msra.mxu0 0.0
    %531 = vmatprep.subr.mxu0 0.0
    %532 = vmatpush1.msra.mxu0 0.0
    %533 = vmatprep.subr.mxu0 0.0
    %534 = vmatpush1.msra.mxu0 0.0
    %535 = vmatprep.subr.mxu0 0.0
    %536 = vmatpush1.msra.mxu0 0.0
    %537 = vmatprep.subr.mxu0 0.0
    %538 = vmatpush1.msra.mxu0 0.0
    %539 = vmatprep.subr.mxu0 0.0
    %540 = vmatpush1.msra.mxu0 0.0
    %541 = vmatprep.subr.mxu0 0.0
    %542 = vmatpush1.msra.mxu0 0.0
    %543 = vmatprep.subr.mxu0 0.0
    %544 = vmatpush1.msra.mxu0 0.0
    %545 = vmatprep.mubr.f32.mxu0 0.0
    %546 = vmatmul.mubr.f32.gmra.mrb[0].mxu0 0.0
    %v547 = vpop.f32.mrb[0].mxu0
    %v548 = vadd.f32 0.0, %v547
    %v549 = vpop.f32.mrb[0].mxu0
    %v550 = vadd.f32 0.0, %v549
    %551 = vdwg.mxu0
    %552 = vmatprep.subr.mxu0 %v420
    %553 = vmatpush1.msra.mxu0 %v419
    %554 = vmatprep.subr.mxu0 %v424
    %555 = vmatpush1.msra.mxu0 %v423
    %556 = vmatprep.subr.mxu0 %v428
    %557 = vmatpush1.msra.mxu0 %v427
    %558 = vmatprep.subr.mxu0 %v432
    %559 = vmatpush1.msra.mxu0 %v431
    %560 = vmatprep.subr.mxu0 %v436
    %561 = vmatpush1.msra.mxu0 %v435
    %562 = vmatprep.subr.mxu0 %v440
    %563 = vmatpush1.msra.mxu0 %v439
    %564 = vmatprep.subr.mxu0 %v444
    %565 = vmatpush1.msra.mxu0 %v443
    %566 = vmatprep.subr.mxu0 %v448
    %567 = vmatpush1.msra.mxu0 %v447
    %568 = vmatprep.subr.mxu0 %v452
    %569 = vmatpush1.msra.mxu0 %v451
    %570 = vmatprep.subr.mxu0 %v456
    %571 = vmatpush1.msra.mxu0 %v455
    %572 = vmatprep.subr.mxu0 %v460
    %573 = vmatpush1.msra.mxu0 %v459
    %574 = vmatprep.subr.mxu0 %v464
    %575 = vmatpush1.msra.mxu0 %v463
    %576 = vmatprep.subr.mxu0 %v468
    %577 = vmatpush1.msra.mxu0 %v467
    %578 = vmatprep.subr.mxu0 %v472
    %579 = vmatpush1.msra.mxu0 %v471
    %580 = vmatprep.subr.mxu0 %v476
    %581 = vmatpush1.msra.mxu0 %v475
    %582 = vmatprep.subr.mxu0 %v480
    %583 = vmatpush1.msra.mxu0 %v479
    %584 = vmatprep.subr.mxu0 0.0
    %585 = vmatpush1.msra.mxu0 0.0
    %586 = vmatprep.subr.mxu0 0.0
    %587 = vmatpush1.msra.mxu0 0.0
    %588 = vmatprep.subr.mxu0 0.0
    %589 = vmatpush1.msra.mxu0 0.0
    %590 = vmatprep.subr.mxu0 0.0
    %591 = vmatpush1.msra.mxu0 0.0
    %592 = vmatprep.subr.mxu0 0.0
    %593 = vmatpush1.msra.mxu0 0.0
    %594 = vmatprep.subr.mxu0 0.0
    %595 = vmatpush1.msra.mxu0 0.0
    %596 = vmatprep.subr.mxu0 0.0
    %597 = vmatpush1.msra.mxu0 0.0
    %598 = vmatprep.subr.mxu0 0.0
    %599 = vmatpush1.msra.mxu0 0.0
    %600 = vmatprep.subr.mxu0 0.0
    %601 = vmatpush1.msra.mxu0 0.0
    %602 = vmatprep.subr.mxu0 0.0
    %603 = vmatpush1.msra.mxu0 0.0
    %604 = vmatprep.subr.mxu0 0.0
    %605 = vmatpush1.msra.mxu0 0.0
    %606 = vmatprep.subr.mxu0 0.0
    %607 = vmatpush1.msra.mxu0 0.0
    %608 = vmatprep.subr.mxu0 0.0
    %609 = vmatpush1.msra.mxu0 0.0
    %610 = vmatprep.subr.mxu0 0.0
    %611 = vmatpush1.msra.mxu0 0.0
    %612 = vmatprep.subr.mxu0 0.0
    %613 = vmatpush1.msra.mxu0 0.0
    %614 = vmatprep.subr.mxu0 0.0
    %615 = vmatpush1.msra.mxu0 0.0
    %616 = vmatprep.mubr.f32.mxu0 0.0
    %617 = vmatmul.mubr.f32.gmra.mrb[0].mxu0 0.0
    %v618 = vpop.f32.mrb[0].mxu0
    %v619 = vadd.f32 0.0, %v618
    %v620 = vpop.f32.mrb[0].mxu0
    %v621 = vadd.f32 0.0, %v620
    %622 = vdwg.mxu0
    %v623 = vadd.f32 %v413, %v548
    %v624 = vadd.f32 %v414, %v550
    %v625 = vadd.f32 %v415, %v619
    %v626 = vadd.f32 %v416, %v621
    %v627 = vmul.f32 %v623, 0.5
    %v628 = vtanh.pop %v627
    %v629 = vadd.f32 %v628, 1.0
    %v630 = vmul.f32 %v629, 0.5
    %v631 = vmul.f32 %v624, 0.5
    %v632 = vtanh.pop %v631
    %v633 = vadd.f32 %v632, 1.0
    %v634 = vmul.f32 %v633, 0.5
    %v635 = vtanh.pop %v625
    %v636 = vmul.f32 %v626, 0.5
    %v637 = vtanh.pop %v636
    %v638 = vadd.f32 %v637, 1.0
    %v639 = vmul.f32 %v638, 0.5
    %v640 = vmul.f32 %v634, 0.0
    %v641 = vmul.f32 %v630, %v635
    %v642 = vadd.f32 %v640, %v641
    %v643 = vtanh.pop %v642
    %v644 = vmul.f32 %v639, %v643
    %s645 = smul.u32 1, 4
    %s646 = smul.addr %s645, 8
    %s647 = scalar_lea.vmem [#allocation2], %s646
    %v648 = vld [vmem:[%s647] sm:$0xff]
    %v649 = vld [vmem:[%s647 + $0x8] sm:$0xff]
    %v650 = vld [vmem:[%s647 + $0x10] sm:$0xff]
    %v651 = vld [vmem:[%s647 + $0x18] sm:$0xff]
    %652 = vmatprep.subr.mxu0 %v418
    %653 = vmatpush1.msra.mxu0 %v417
    %654 = vmatprep.subr.mxu0 %v422
    %655 = vmatpush1.msra.mxu0 %v421
    %656 = vmatprep.subr.mxu0 %v426
    %657 = vmatpush1.msra.mxu0 %v425
    %658 = vmatprep.subr.mxu0 %v430
    %659 = vmatpush1.msra.mxu0 %v429
    %660 = vmatprep.subr.mxu0 %v434
    %661 = vmatpush1.msra.mxu0 %v433
    %662 = vmatprep.subr.mxu0 %v438
    %663 = vmatpush1.msra.mxu0 %v437
    %664 = vmatprep.subr.mxu0 %v442
    %665 = vmatpush1.msra.mxu0 %v441
    %666 = vmatprep.subr.mxu0 %v446
    %667 = vmatpush1.msra.mxu0 %v445
    %668 = vmatprep.subr.mxu0 %v450
    %669 = vmatpush1.msra.mxu0 %v449
    %670 = vmatprep.subr.mxu0 %v454
    %671 = vmatpush1.msra.mxu0 %v453
    %672 = vmatprep.subr.mxu0 %v458
    %673 = vmatpush1.msra.mxu0 %v457
    %674 = vmatprep.subr.mxu0 %v462
    %675 = vmatpush1.msra.mxu0 %v461
    %676 = vmatprep.subr.mxu0 %v466
    %677 = vmatpush1.msra.mxu0 %v465
    %678 = vmatprep.subr.mxu0 %v470
    %679 = vmatpush1.msra.mxu0 %v469
    %680 = vmatprep.subr.mxu0 %v474
    %681 = vmatpush1.msra.mxu0 %v473
    %682 = vmatprep.subr.mxu0 %v478
    %683 = vmatpush1.msra.mxu0 %v477
    %684 = vmatprep.subr.mxu0 0.0
    %685 = vmatpush1.msra.mxu0 0.0
    %686 = vmatprep.subr.mxu0 0.0
    %687 = vmatpush1.msra.mxu0 0.0
    %688 = vmatprep.subr.mxu0 0.0
    %689 = vmatpush1.msra.mxu0 0.0
    %690 = vmatprep.subr.mxu0 0.0
    %691 = vmatpush1.msra.mxu0 0.0
    %692 = vmatprep.subr.mxu0 0.0
    %693 = vmatpush1.msra.mxu0 0.0
    %694 = vmatprep.subr.mxu0 0.0
    %695 = vmatpush1.msra.mxu0 0.0
    %696 = vmatprep.subr.mxu0 0.0
    %697 = vmatpush1.msra.mxu0 0.0
    %698 = vmatprep.subr.mxu0 0.0
    %699 = vmatpush1.msra.mxu0 0.0
    %700 = vmatprep.subr.mxu0 0.0
    %701 = vmatpush1.msra.mxu0 0.0
    %702 = vmatprep.subr.mxu0 0.0
    %703 = vmatpush1.msra.mxu0 0.0
    %704 = vmatprep.subr.mxu0 0.0
    %705 = vmatpush1.msra.mxu0 0.0
    %706 = vmatprep.subr.mxu0 0.0
    %707 = vmatpush1.msra.mxu0 0.0
    %708 = vmatprep.subr.mxu0 0.0
    %709 = vmatpush1.msra.mxu0 0.0
    %710 = vmatprep.subr.mxu0 0.0
    %711 = vmatpush1.msra.mxu0 0.0
    %712 = vmatprep.subr.mxu0 0.0
    %713 = vmatpush1.msra.mxu0 0.0
    %714 = vmatprep.subr.mxu0 0.0
    %715 = vmatpush1.msra.mxu0 0.0
    %716 = vmatprep.mubr.f32.mxu0 0.0
    %717 = vmatmul.mubr.f32.gmra.mrb[0].mxu0 %v644
    %v718 = vpop.f32.mrb[0].mxu0
    %v719 = vadd.f32 0.0, %v718
    %v720 = vpop.f32.mrb[0].mxu0
    %v721 = vadd.f32 0.0, %v720
    %722 = vdwg.mxu0
    %723 = vmatprep.subr.mxu0 %v420
    %724 = vmatpush1.msra.mxu0 %v419
    %725 = vmatprep.subr.mxu0 %v424
    %726 = vmatpush1.msra.mxu0 %v423
    %727 = vmatprep.subr.mxu0 %v428
    %728 = vmatpush1.msra.mxu0 %v427
    %729 = vmatprep.subr.mxu0 %v432
    %730 = vmatpush1.msra.mxu0 %v431
    %731 = vmatprep.subr.mxu0 %v436
    %732 = vmatpush1.msra.mxu0 %v435
    %733 = vmatprep.subr.mxu0 %v440
    %734 = vmatpush1.msra.mxu0 %v439
    %735 = vmatprep.subr.mxu0 %v444
    %736 = vmatpush1.msra.mxu0 %v443
    %737 = vmatprep.subr.mxu0 %v448
    %738 = vmatpush1.msra.mxu0 %v447
    %739 = vmatprep.subr.mxu0 %v452
    %740 = vmatpush1.msra.mxu0 %v451
    %741 = vmatprep.subr.mxu0 %v456
    %742 = vmatpush1.msra.mxu0 %v455
    %743 = vmatprep.subr.mxu0 %v460
    %744 = vmatpush1.msra.mxu0 %v459
    %745 = vmatprep.subr.mxu0 %v464
    %746 = vmatpush1.msra.mxu0 %v463
    %747 = vmatprep.subr.mxu0 %v468
    %748 = vmatpush1.msra.mxu0 %v467
    %749 = vmatprep.subr.mxu0 %v472
    %750 = vmatpush1.msra.mxu0 %v471
    %751 = vmatprep.subr.mxu0 %v476
    %752 = vmatpush1.msra.mxu0 %v475
    %753 = vmatprep.subr.mxu0 %v480
    %754 = vmatpush1.msra.mxu0 %v479
    %755 = vmatprep.subr.mxu0 0.0
    %756 = vmatpush1.msra.mxu0 0.0
    %757 = vmatprep.subr.mxu0 0.0
    %758 = vmatpush1.msra.mxu0 0.0
    %759 = vmatprep.subr.mxu0 0.0
    %760 = vmatpush1.msra.mxu0 0.0
    %761 = vmatprep.subr.mxu0 0.0
    %762 = vmatpush1.msra.mxu0 0.0
    %763 = vmatprep.subr.mxu0 0.0
    %764 = vmatpush1.msra.mxu0 0.0
    %765 = vmatprep.subr.mxu0 0.0
    %766 = vmatpush1.msra.mxu0 0.0
    %767 = vmatprep.subr.mxu0 0.0
    %768 = vmatpush1.msra.mxu0 0.0
    %769 = vmatprep.subr.mxu0 0.0
    %770 = vmatpush1.msra.mxu0 0.0
    %771 = vmatprep.subr.mxu0 0.0
    %772 = vmatpush1.msra.mxu0 0.0
    %773 = vmatprep.subr.mxu0 0.0
    %774 = vmatpush1.msra.mxu0 0.0
    %775 = vmatprep.subr.mxu0 0.0
    %776 = vmatpush1.msra.mxu0 0.0
    %777 = vmatprep.subr.mxu0 0.0
    %778 = vmatpush1.msra.mxu0 0.0
    %779 = vmatprep.subr.mxu0 0.0
    %780 = vmatpush1.msra.mxu0 0.0
    %781 = vmatprep.subr.mxu0 0.0
    %782 = vmatpush1.msra.mxu0 0.0
    %783 = vmatprep.subr.mxu0 0.0
    %784 = vmatpush1.msra.mxu0 0.0
    %785 = vmatprep.subr.mxu0 0.0
    %786 = vmatpush1.msra.mxu0 0.0
    %787 = vmatprep.mubr.f32.mxu0 0.0
    %788 = vmatmul.mubr.f32.gmra.mrb[0].mxu0 %v644
    %v789 = vpop.f32.mrb[0].mxu0
    %v790 = vadd.f32 0.0, %v789
    %v791 = vpop.f32.mrb[0].mxu0
    %v792 = vadd.f32 0.0, %v791
    %793 = vdwg.mxu0
    %v794 = vadd.f32 %v648, %v719
    %v795 = vadd.f32 %v649, %v721
    %v796 = vadd.f32 %v650, %v790
    %v797 = vadd.f32 %v651, %v792
    %v798 = vmul.f32 %v794, 0.5
    %v799 = vtanh.pop %v798
    %v800 = vadd.f32 %v799, 1.0
    %v801 = vmul.f32 %v800, 0.5
    %v802 = vmul.f32 %v795, 0.5
    %v803 = vtanh.pop %v802
    %v804 = vadd.f32 %v803, 1.0
    %v805 = vmul.f32 %v804, 0.5
    %v806 = vtanh.pop %v796
    %v807 = vmul.f32 %v797, 0.5
    %v808 = vtanh.pop %v807
    %v809 = vadd.f32 %v808, 1.0
    %v810 = vmul.f32 %v809, 0.5
    %v811 = vmul.f32 %v805, %v642
    %v812 = vmul.f32 %v801, %v806
    %v813 = vadd.f32 %v811, %v812
    %v814 = vtanh.pop %v813
    %v815 = vmul.f32 %v810, %v814
    %s816 = smul.u32 2, 4
    %s817 = smul.addr %s816, 8
    %s818 = scalar_lea.vmem [#allocation2], %s817
    %v819 = vld [vmem:[%s818] sm:$0xff]
    %v820 = vld [vmem:[%s818 + $0x8] sm:$0xff]
    %v821 = vld [vmem:[%s818 + $0x10] sm:$0xff]
    %v822 = vld [vmem:[%s818 + $0x18] sm:$0xff]
    %823 = vmatprep.subr.mxu0 %v418
    %824 = vmatpush1.msra.mxu0 %v417
    %825 = vmatprep.subr.mxu0 %v422
    %826 = vmatpush1.msra.mxu0 %v421
    %827 = vmatprep.subr.mxu0 %v426
    %828 = vmatpush1.msra.mxu0 %v425
    %829 = vmatprep.subr.mxu0 %v430
    %830 = vmatpush1.msra.mxu0 %v429
    %831 = vmatprep.subr.mxu0 %v434
    %832 = vmatpush1.msra.mxu0 %v433
    %833 = vmatprep.subr.mxu0 %v438
    %834 = vmatpush1.msra.mxu0 %v437
    %835 = vmatprep.subr.mxu0 %v442
    %836 = vmatpush1.msra.mxu0 %v441
    %837 = vmatprep.subr.mxu0 %v446
    %838 = vmatpush1.msra.mxu0 %v445
    %839 = vmatprep.subr.mxu0 %v450
    %840 = vmatpush1.msra.mxu0 %v449
    %841 = vmatprep.subr.mxu0 %v454
    %842 = vmatpush1.msra.mxu0 %v453
    %843 = vmatprep.subr.mxu0 %v458
    %844 = vmatpush1.msra.mxu0 %v457
    %845 = vmatprep.subr.mxu0 %v462
    %846 = vmatpush1.msra.mxu0 %v461
    %847 = vmatprep.subr.mxu0 %v466
    %848 = vmatpush1.msra.mxu0 %v465
    %849 = vmatprep.subr.mxu0 %v470
    %850 = vmatpush1.msra.mxu0 %v469
    %851 = vmatprep.subr.mxu0 %v474
    %852 = vmatpush1.msra.mxu0 %v473
    %853 = vmatprep.subr.mxu0 %v478
    %854 = vmatpush1.msra.mxu0 %v477
    %855 = vmatprep.subr.mxu0 0.0
    %856 = vmatpush1.msra.mxu0 0.0
    %857 = vmatprep.subr.mxu0 0.0
    %858 = vmatpush1.msra.mxu0 0.0
    %859 = vmatprep.subr.mxu0 0.0
    %860 = vmatpush1.msra.mxu0 0.0
    %861 = vmatprep.subr.mxu0 0.0
    %862 = vmatpush1.msra.mxu0 0.0
    %863 = vmatprep.subr.mxu0 0.0
    %864 = vmatpush1.msra.mxu0 0.0
    %865 = vmatprep.subr.mxu0 0.0
    %866 = vmatpush1.msra.mxu0 0.0
    %867 = vmatprep.subr.mxu0 0.0
    %868 = vmatpush1.msra.mxu0 0.0
    %869 = vmatprep.subr.mxu0 0.0
    %870 = vmatpush1.msra.mxu0 0.0
    %871 = vmatprep.subr.mxu0 0.0
    %872 = vmatpush1.msra.mxu0 0.0
    %873 = vmatprep.subr.mxu0 0.0
    %874 = vmatpush1.msra.mxu0 0.0
    %875 = vmatprep.subr.mxu0 0.0
    %876 = vmatpush1.msra.mxu0 0.0
    %877 = vmatprep.subr.mxu0 0.0
    %878 = vmatpush1.msra.mxu0 0.0
    %879 = vmatprep.subr.mxu0 0.0
    %880 = vmatpush1.msra.mxu0 0.0
    %881 = vmatprep.subr.mxu0 0.0
    %882 = vmatpush1.msra.mxu0 0.0
    %883 = vmatprep.subr.mxu0 0.0
    %884 = vmatpush1.msra.mxu0 0.0
    %885 = vmatprep.subr.mxu0 0.0
    %886 = vmatpush1.msra.mxu0 0.0
    %887 = vmatprep.mubr.f32.mxu0 0.0
    %888 = vmatmul.mubr.f32.gmra.mrb[0].mxu0 %v815
    %v889 = vpop.f32.mrb[0].mxu0
    %v890 = vadd.f32 0.0, %v889
    %v891 = vpop.f32.mrb[0].mxu0
    %v892 = vadd.f32 0.0, %v891
    %893 = vdwg.mxu0
    %894 = vmatprep.subr.mxu0 %v420
    %895 = vmatpush1.msra.mxu0 %v419
    %896 = vmatprep.subr.mxu0 %v424
    %897 = vmatpush1.msra.mxu0 %v423
    %898 = vmatprep.subr.mxu0 %v428
    %899 = vmatpush1.msra.mxu0 %v427
    %900 = vmatprep.subr.mxu0 %v432
    %901 = vmatpush1.msra.mxu0 %v431
    %902 = vmatprep.subr.mxu0 %v436
    %903 = vmatpush1.msra.mxu0 %v435
    %904 = vmatprep.subr.mxu0 %v440
    %905 = vmatpush1.msra.mxu0 %v439
    %906 = vmatprep.subr.mxu0 %v444
    %907 = vmatpush1.msra.mxu0 %v443
    %908 = vmatprep.subr.mxu0 %v448
    %909 = vmatpush1.msra.mxu0 %v447
    %910 = vmatprep.subr.mxu0 %v452
    %911 = vmatpush1.msra.mxu0 %v451
    %912 = vmatprep.subr.mxu0 %v456
    %913 = vmatpush1.msra.mxu0 %v455
    %914 = vmatprep.subr.mxu0 %v460
    %915 = vmatpush1.msra.mxu0 %v459
    %916 = vmatprep.subr.mxu0 %v464
    %917 = vmatpush1.msra.mxu0 %v463
    %918 = vmatprep.subr.mxu0 %v468
    %919 = vmatpush1.msra.mxu0 %v467
    %920 = vmatprep.subr.mxu0 %v472
    %921 = vmatpush1.msra.mxu0 %v471
    %922 = vmatprep.subr.mxu0 %v476
    %923 = vmatpush1.msra.mxu0 %v475
    %924 = vmatprep.subr.mxu0 %v480
    %925 = vmatpush1.msra.mxu0 %v479
    %926 = vmatprep.subr.mxu0 0.0
    %927 = vmatpush1.msra.mxu0 0.0
    %928 = vmatprep.subr.mxu0 0.0
    %929 = vmatpush1.msra.mxu0 0.0
    %930 = vmatprep.subr.mxu0 0.0
    %931 = vmatpush1.msra.mxu0 0.0
    %932 = vmatprep.subr.mxu0 0.0
    %933 = vmatpush1.msra.mxu0 0.0
    %934 = vmatprep.subr.mxu0 0.0
    %935 = vmatpush1.msra.mxu0 0.0
    %936 = vmatprep.subr.mxu0 0.0
    %937 = vmatpush1.msra.mxu0 0.0
    %938 = vmatprep.subr.mxu0 0.0
    %939 = vmatpush1.msra.mxu0 0.0
    %940 = vmatprep.subr.mxu0 0.0
    %941 = vmatpush1.msra.mxu0 0.0
    %942 = vmatprep.subr.mxu0 0.0
    %943 = vmatpush1.msra.mxu0 0.0
    %944 = vmatprep.subr.mxu0 0.0
    %945 = vmatpush1.msra.mxu0 0.0
    %946 = vmatprep.subr.mxu0 0.0
    %947 = vmatpush1.msra.mxu0 0.0
    %948 = vmatprep.subr.mxu0 0.0
    %949 = vmatpush1.msra.mxu0 0.0
    %950 = vmatprep.subr.mxu0 0.0
    %951 = vmatpush1.msra.mxu0 0.0
    %952 = vmatprep.subr.mxu0 0.0
    %953 = vmatpush1.msra.mxu0 0.0
    %954 = vmatprep.subr.mxu0 0.0
    %955 = vmatpush1.msra.mxu0 0.0
    %956 = vmatprep.subr.mxu0 0.0
    %957 = vmatpush1.msra.mxu0 0.0
    %958 = vmatprep.mubr.f32.mxu0 0.0
    %959 = vmatmul.mubr.f32.gmra.mrb[0].mxu0 %v815
    %v960 = vpop.f32.mrb[0].mxu0
    %v961 = vadd.f32 0.0, %v960
    %v962 = vpop.f32.mrb[0].mxu0
    %v963 = vadd.f32 0.0, %v962
    %964 = vdwg.mxu0
    %v965 = vadd.f32 %v819, %v890
    %v966 = vadd.f32 %v820, %v892
    %v967 = vadd.f32 %v821, %v961
    %v968 = vadd.f32 %v822, %v963
    %v969 = vmul.f32 %v965, 0.5
    %v970 = vtanh.pop %v969
    %v971 = vadd.f32 %v970, 1.0
    %v972 = vmul.f32 %v971, 0.5
    %v973 = vmul.f32 %v966, 0.5
    %v974 = vtanh.pop %v973
    %v975 = vadd.f32 %v974, 1.0
    %v976 = vmul.f32 %v975, 0.5
    %v977 = vtanh.pop %v967
    %v978 = vmul.f32 %v968, 0.5
    %v979 = vtanh.pop %v978
    %v980 = vadd.f32 %v979, 1.0
    %v981 = vmul.f32 %v980, 0.5
    %v982 = vmul.f32 %v976, %v813
    %v983 = vmul.f32 %v972, %v977
    %v984 = vadd.f32 %v982, %v983
    %v985 = vtanh.pop %v984
    %v986 = vmul.f32 %v981, %v985
    %s987 = smul.u32 3, 4
    %s988 = smul.addr %s987, 8
    %s989 = scalar_lea.vmem [#allocation2], %s988
    %v990 = vld [vmem:[%s989] sm:$0xff]
    %v991 = vld [vmem:[%s989 + $0x8] sm:$0xff]
    %v992 = vld [vmem:[%s989 + $0x10] sm:$0xff]
    %v993 = vld [vmem:[%s989 + $0x18] sm:$0xff]
    %994 = vmatprep.subr.mxu0 %v418
    %995 = vmatpush1.msra.mxu0 %v417
    %996 = vmatprep.subr.mxu0 %v422
    %997 = vmatpush1.msra.mxu0 %v421
    %998 = vmatprep.subr.mxu0 %v426
    %999 = vmatpush1.msra.mxu0 %v425
    %1000 = vmatprep.subr.mxu0 %v430
    %1001 = vmatpush1.msra.mxu0 %v429
    %1002 = vmatprep.subr.mxu0 %v434
    %1003 = vmatpush1.msra.mxu0 %v433
    %1004 = vmatprep.subr.mxu0 %v438
    %1005 = vmatpush1.msra.mxu0 %v437
    %1006 = vmatprep.subr.mxu0 %v442
    %1007 = vmatpush1.msra.mxu0 %v441
    %1008 = vmatprep.subr.mxu0 %v446
    %1009 = vmatpush1.msra.mxu0 %v445
    %1010 = vmatprep.subr.mxu0 %v450
    %1011 = vmatpush1.msra.mxu0 %v449
    %1012 = vmatprep.subr.mxu0 %v454
    %1013 = vmatpush1.msra.mxu0 %v453
    %1014 = vmatprep.subr.mxu0 %v458
    %1015 = vmatpush1.msra.mxu0 %v457
    %1016 = vmatprep.subr.mxu0 %v462
    %1017 = vmatpush1.msra.mxu0 %v461
    %1018 = vmatprep.subr.mxu0 %v466
    %1019 = vmatpush1.msra.mxu0 %v465
    %1020 = vmatprep.subr.mxu0 %v470
    %1021 = vmatpush1.msra.mxu0 %v469
    %1022 = vmatprep.subr.mxu0 %v474
    %1023 = vmatpush1.msra.mxu0 %v473
    %1024 = vmatprep.subr.mxu0 %v478
    %1025 = vmatpush1.msra.mxu0 %v477
    %1026 = vmatprep.subr.mxu0 0.0
    %1027 = vmatpush1.msra.mxu0 0.0
    %1028 = vmatprep.subr.mxu0 0.0
    %1029 = vmatpush1.msra.mxu0 0.0
    %1030 = vmatprep.subr.mxu0 0.0
    %1031 = vmatpush1.msra.mxu0 0.0
    %1032 = vmatprep.subr.mxu0 0.0
    %1033 = vmatpush1.msra.mxu0 0.0
    %1034 = vmatprep.subr.mxu0 0.0
    %1035 = vmatpush1.msra.mxu0 0.0
    %1036 = vmatprep.subr.mxu0 0.0
    %1037 = vmatpush1.msra.mxu0 0.0
    %1038 = vmatprep.subr.mxu0 0.0
    %1039 = vmatpush1.msra.mxu0 0.0
    %1040 = vmatprep.subr.mxu0 0.0
    %1041 = vmatpush1.msra.mxu0 0.0
    %1042 = vmatprep.subr.mxu0 0.0
    %1043 = vmatpush1.msra.mxu0 0.0
    %1044 = vmatprep.subr.mxu0 0.0
    %1045 = vmatpush1.msra.mxu0 0.0
    %1046 = vmatprep.subr.mxu0 0.0
    %1047 = vmatpush1.msra.mxu0 0.0
    %1048 = vmatprep.subr.mxu0 0.0
    %1049 = vmatpush1.msra.mxu0 0.0
    %1050 = vmatprep.subr.mxu0 0.0
    %1051 = vmatpush1.msra.mxu0 0.0
    %1052 = vmatprep.subr.mxu0 0.0
    %1053 = vmatpush1.msra.mxu0 0.0
    %1054 = vmatprep.subr.mxu0 0.0
    %1055 = vmatpush1.msra.mxu0 0.0
    %1056 = vmatprep.subr.mxu0 0.0
    %1057 = vmatpush1.msra.mxu0 0.0
    %1058 = vmatprep.mubr.f32.mxu0 0.0
    %1059 = vmatmul.mubr.f32.gmra.mrb[0].mxu0 %v986
    %v1060 = vpop.f32.mrb[0].mxu0
    %v1061 = vadd.f32 0.0, %v1060
    %v1062 = vpop.f32.mrb[0].mxu0
    %v1063 = vadd.f32 0.0, %v1062
    %1064 = vdwg.mxu0
    %1065 = vmatprep.subr.mxu0 %v420
    %1066 = vmatpush1.msra.mxu0 %v419
    %1067 = vmatprep.subr.mxu0 %v424
    %1068 = vmatpush1.msra.mxu0 %v423
    %1069 = vmatprep.subr.mxu0 %v428
    %1070 = vmatpush1.msra.mxu0 %v427
    %1071 = vmatprep.subr.mxu0 %v432
    %1072 = vmatpush1.msra.mxu0 %v431
    %1073 = vmatprep.subr.mxu0 %v436
    %1074 = vmatpush1.msra.mxu0 %v435
    %1075 = vmatprep.subr.mxu0 %v440
    %1076 = vmatpush1.msra.mxu0 %v439
    %1077 = vmatprep.subr.mxu0 %v444
    %1078 = vmatpush1.msra.mxu0 %v443
    %1079 = vmatprep.subr.mxu0 %v448
    %1080 = vmatpush1.msra.mxu0 %v447
    %1081 = vmatprep.subr.mxu0 %v452
    %1082 = vmatpush1.msra.mxu0 %v451
    %1083 = vmatprep.subr.mxu0 %v456
    %1084 = vmatpush1.msra.mxu0 %v455
    %1085 = vmatprep.subr.mxu0 %v460
    %1086 = vmatpush1.msra.mxu0 %v459
    %1087 = vmatprep.subr.mxu0 %v464
    %1088 = vmatpush1.msra.mxu0 %v463
    %1089 = vmatprep.subr.mxu0 %v468
    %1090 = vmatpush1.msra.mxu0 %v467
    %1091 = vmatprep.subr.mxu0 %v472
    %1092 = vmatpush1.msra.mxu0 %v471
    %1093 = vmatprep.subr.mxu0 %v476
    %1094 = vmatpush1.msra.mxu0 %v475
    %1095 = vmatprep.subr.mxu0 %v480
    %1096 = vmatpush1.msra.mxu0 %v479
    %1097 = vmatprep.subr.mxu0 0.0
    %1098 = vmatpush1.msra.mxu0 0.0
    %1099 = vmatprep.subr.mxu0 0.0
    %1100 = vmatpush1.msra.mxu0 0.0
    %1101 = vmatprep.subr.mxu0 0.0
    %1102 = vmatpush1.msra.mxu0 0.0
    %1103 = vmatprep.subr.mxu0 0.0
    %1104 = vmatpush1.msra.mxu0 0.0
    %1105 = vmatprep.subr.mxu0 0.0
    %1106 = vmatpush1.msra.mxu0 0.0
    %1107 = vmatprep.subr.mxu0 0.0
    %1108 = vmatpush1.msra.mxu0 0.0
    %1109 = vmatprep.subr.mxu0 0.0
    %1110 = vmatpush1.msra.mxu0 0.0
    %1111 = vmatprep.subr.mxu0 0.0
    %1112 = vmatpush1.msra.mxu0 0.0
    %1113 = vmatprep.subr.mxu0 0.0
    %1114 = vmatpush1.msra.mxu0 0.0
    %1115 = vmatprep.subr.mxu0 0.0
    %1116 = vmatpush1.msra.mxu0 0.0
    %1117 = vmatprep.subr.mxu0 0.0
    %1118 = vmatpush1.msra.mxu0 0.0
    %1119 = vmatprep.subr.mxu0 0.0
    %1120 = vmatpush1.msra.mxu0 0.0
    %1121 = vmatprep.subr.mxu0 0.0
    %1122 = vmatpush1.msra.mxu0 0.0
    %1123 = vmatprep.subr.mxu0 0.0
    %1124 = vmatpush1.msra.mxu0 0.0
    %1125 = vmatprep.subr.mxu0 0.0
    %1126 = vmatpush1.msra.mxu0 0.0
    %1127 = vmatprep.subr.mxu0 0.0
    %1128 = vmatpush1.msra.mxu0 0.0
    %1129 = vmatprep.mubr.f32.mxu0 0.0
    %1130 = vmatmul.mubr.f32.gmra.mrb[0].mxu0 %v986
    %v1131 = vpop.f32.mrb[0].mxu0
    %v1132 = vadd.f32 0.0, %v1131
    %v1133 = vpop.f32.mrb[0].mxu0
    %v1134 = vadd.f32 0.0, %v1133
    %1135 = vdwg.mxu0
    %v1136 = vadd.f32 %v990, %v1061
    %v1137 = vadd.f32 %v991, %v1063
    %v1138 = vadd.f32 %v992, %v1132
    %v1139 = vadd.f32 %v993, %v1134
    %v1140 = vmul.f32 %v1136, 0.5
    %v1141 = vtanh.pop %v1140
    %v1142 = vadd.f32 %v1141, 1.0
    %v1143 = vmul.f32 %v1142, 0.5
    %v1144 = vmul.f32 %v1137, 0.5
    %v1145 = vtanh.pop %v1144
    %v1146 = vadd.f32 %v1145, 1.0
    %v1147 = vmul.f32 %v1146, 0.5
    %v1148 = vtanh.pop %v1138
    %v1149 = vmul.f32 %v1139, 0.5
    %v1150 = vtanh.pop %v1149
    %v1151 = vadd.f32 %v1150, 1.0
    %v1152 = vmul.f32 %v1151, 0.5
    %v1153 = vmul.f32 %v1147, %v984
    %v1154 = vmul.f32 %v1143, %v1148
    %v1155 = vadd.f32 %v1153, %v1154
    %v1156 = vtanh.pop %v1155
    %v1157 = vmul.f32 %v1152, %v1156
    %s1158 = smul.u32 4, 4
    %s1159 = smul.addr %s1158, 8
    %s1160 = scalar_lea.vmem [#allocation2], %s1159
    %v1161 = vld [vmem:[%s1160] sm:$0xff]
    %v1162 = vld [vmem:[%s1160 + $0x8] sm:$0xff]
    %v1163 = vld [vmem:[%s1160 + $0x10] sm:$0xff]
    %v1164 = vld [vmem:[%s1160 + $0x18] sm:$0xff]
    %1165 = vmatprep.subr.mxu0 %v418
    %1166 = vmatpush1.msra.mxu0 %v417
    %1167 = vmatprep.subr.mxu0 %v422
    %1168 = vmatpush1.msra.mxu0 %v421
    %1169 = vmatprep.subr.mxu0 %v426
    %1170 = vmatpush1.msra.mxu0 %v425
    %1171 = vmatprep.subr.mxu0 %v430
    %1172 = vmatpush1.msra.mxu0 %v429
    %1173 = vmatprep.subr.mxu0 %v434
    %1174 = vmatpush1.msra.mxu0 %v433
    %1175 = vmatprep.subr.mxu0 %v438
    %1176 = vmatpush1.msra.mxu0 %v437
    %1177 = vmatprep.subr.mxu0 %v442
    %1178 = vmatpush1.msra.mxu0 %v441
    %1179 = vmatprep.subr.mxu0 %v446
    %1180 = vmatpush1.msra.mxu0 %v445
    %1181 = vmatprep.subr.mxu0 %v450
    %1182 = vmatpush1.msra.mxu0 %v449
    %1183 = vmatprep.subr.mxu0 %v454
    %1184 = vmatpush1.msra.mxu0 %v453
    %1185 = vmatprep.subr.mxu0 %v458
    %1186 = vmatpush1.msra.mxu0 %v457
    %1187 = vmatprep.subr.mxu0 %v462
    %1188 = vmatpush1.msra.mxu0 %v461
    %1189 = vmatprep.subr.mxu0 %v466
    %1190 = vmatpush1.msra.mxu0 %v465
    %1191 = vmatprep.subr.mxu0 %v470
    %1192 = vmatpush1.msra.mxu0 %v469
    %1193 = vmatprep.subr.mxu0 %v474
    %1194 = vmatpush1.msra.mxu0 %v473
    %1195 = vmatprep.subr.mxu0 %v478
    %1196 = vmatpush1.msra.mxu0 %v477
    %1197 = vmatprep.subr.mxu0 0.0
    %1198 = vmatpush1.msra.mxu0 0.0
    %1199 = vmatprep.subr.mxu0 0.0
    %1200 = vmatpush1.msra.mxu0 0.0
    %1201 = vmatprep.subr.mxu0 0.0
    %1202 = vmatpush1.msra.mxu0 0.0
    %1203 = vmatprep.subr.mxu0 0.0
    %1204 = vmatpush1.msra.mxu0 0.0
    %1205 = vmatprep.subr.mxu0 0.0
    %1206 = vmatpush1.msra.mxu0 0.0
    %1207 = vmatprep.subr.mxu0 0.0
    %1208 = vmatpush1.msra.mxu0 0.0
    %1209 = vmatprep.subr.mxu0 0.0
    %1210 = vmatpush1.msra.mxu0 0.0
    %1211 = vmatprep.subr.mxu0 0.0
    %1212 = vmatpush1.msra.mxu0 0.0
    %1213 = vmatprep.subr.mxu0 0.0
    %1214 = vmatpush1.msra.mxu0 0.0
    %1215 = vmatprep.subr.mxu0 0.0
    %1216 = vmatpush1.msra.mxu0 0.0
    %1217 = vmatprep.subr.mxu0 0.0
    %1218 = vmatpush1.msra.mxu0 0.0
    %1219 = vmatprep.subr.mxu0 0.0
    %1220 = vmatpush1.msra.mxu0 0.0
    %1221 = vmatprep.subr.mxu0 0.0
    %1222 = vmatpush1.msra.mxu0 0.0
    %1223 = vmatprep.subr.mxu0 0.0
    %1224 = vmatpush1.msra.mxu0 0.0
    %1225 = vmatprep.subr.mxu0 0.0
    %1226 = vmatpush1.msra.mxu0 0.0
    %1227 = vmatprep.subr.mxu0 0.0
    %1228 = vmatpush1.msra.mxu0 0.0
    %1229 = vmatprep.mubr.f32.mxu0 0.0
    %1230 = vmatmul.mubr.f32.gmra.mrb[0].mxu0 %v1157
    %v1231 = vpop.f32.mrb[0].mxu0
    %v1232 = vadd.f32 0.0, %v1231
    %v1233 = vpop.f32.mrb[0].mxu0
    %v1234 = vadd.f32 0.0, %v1233
    %1235 = vdwg.mxu0
    %1236 = vmatprep.subr.mxu0 %v420
    %1237 = vmatpush1.msra.mxu0 %v419
    %1238 = vmatprep.subr.mxu0 %v424
    %1239 = vmatpush1.msra.mxu0 %v423
    %1240 = vmatprep.subr.mxu0 %v428
    %1241 = vmatpush1.msra.mxu0 %v427
    %1242 = vmatprep.subr.mxu0 %v432
    %1243 = vmatpush1.msra.mxu0 %v431
    %1244 = vmatprep.subr.mxu0 %v436
    %1245 = vmatpush1.msra.mxu0 %v435
    %1246 = vmatprep.subr.mxu0 %v440
    %1247 = vmatpush1.msra.mxu0 %v439
    %1248 = vmatprep.subr.mxu0 %v444
    %1249 = vmatpush1.msra.mxu0 %v443
    %1250 = vmatprep.subr.mxu0 %v448
    %1251 = vmatpush1.msra.mxu0 %v447
    %1252 = vmatprep.subr.mxu0 %v452
    %1253 = vmatpush1.msra.mxu0 %v451
    %1254 = vmatprep.subr.mxu0 %v456
    %1255 = vmatpush1.msra.mxu0 %v455
    %1256 = vmatprep.subr.mxu0 %v460
    %1257 = vmatpush1.msra.mxu0 %v459
    %1258 = vmatprep.subr.mxu0 %v464
    %1259 = vmatpush1.msra.mxu0 %v463
    %1260 = vmatprep.subr.mxu0 %v468
    %1261 = vmatpush1.msra.mxu0 %v467
    %1262 = vmatprep.subr.mxu0 %v472
    %1263 = vmatpush1.msra.mxu0 %v471
    %1264 = vmatprep.subr.mxu0 %v476
    %1265 = vmatpush1.msra.mxu0 %v475
    %1266 = vmatprep.subr.mxu0 %v480
    %1267 = vmatpush1.msra.mxu0 %v479
    %1268 = vmatprep.subr.mxu0 0.0
    %1269 = vmatpush1.msra.mxu0 0.0
    %1270 = vmatprep.subr.mxu0 0.0
    %1271 = vmatpush1.msra.mxu0 0.0
    %1272 = vmatprep.subr.mxu0 0.0
    %1273 = vmatpush1.msra.mxu0 0.0
    %1274 = vmatprep.subr.mxu0 0.0
    %1275 = vmatpush1.msra.mxu0 0.0
    %1276 = vmatprep.subr.mxu0 0.0
    %1277 = vmatpush1.msra.mxu0 0.0
    %1278 = vmatprep.subr.mxu0 0.0
    %1279 = vmatpush1.msra.mxu0 0.0
    %1280 = vmatprep.subr.mxu0 0.0
    %1281 = vmatpush1.msra.mxu0 0.0
    %1282 = vmatprep.subr.mxu0 0.0
    %1283 = vmatpush1.msra.mxu0 0.0
    %1284 = vmatprep.subr.mxu0 0.0
    %1285 = vmatpush1.msra.mxu0 0.0
    %1286 = vmatprep.subr.mxu0 0.0
    %1287 = vmatpush1.msra.mxu0 0.0
    %1288 = vmatprep.subr.mxu0 0.0
    %1289 = vmatpush1.msra.mxu0 0.0
    %1290 = vmatprep.subr.mxu0 0.0
    %1291 = vmatpush1.msra.mxu0 0.0
    %1292 = vmatprep.subr.mxu0 0.0
    %1293 = vmatpush1.msra.mxu0 0.0
    %1294 = vmatprep.subr.mxu0 0.0
    %1295 = vmatpush1.msra.mxu0 0.0
    %1296 = vmatprep.subr.mxu0 0.0
    %1297 = vmatpush1.msra.mxu0 0.0
    %1298 = vmatprep.subr.mxu0 0.0
    %1299 = vmatpush1.msra.mxu0 0.0
    %1300 = vmatprep.mubr.f32.mxu0 0.0
    %1301 = vmatmul.mubr.f32.gmra.mrb[0].mxu0 %v1157
    %v1302 = vpop.f32.mrb[0].mxu0
    %v1303 = vadd.f32 0.0, %v1302
    %v1304 = vpop.f32.mrb[0].mxu0
    %v1305 = vadd.f32 0.0, %v1304
    %1306 = vdwg.mxu0
    %v1307 = vadd.f32 %v1161, %v1232
    %v1308 = vadd.f32 %v1162, %v1234
    %v1309 = vadd.f32 %v1163, %v1303
    %v1310 = vadd.f32 %v1164, %v1305
    %v1311 = vmul.f32 %v1307, 0.5
    %v1312 = vtanh.pop %v1311
    %v1313 = vadd.f32 %v1312, 1.0
    %v1314 = vmul.f32 %v1313, 0.5
    %v1315 = vmul.f32 %v1308, 0.5
    %v1316 = vtanh.pop %v1315
    %v1317 = vadd.f32 %v1316, 1.0
    %v1318 = vmul.f32 %v1317, 0.5
    %v1319 = vtanh.pop %v1309
    %v1320 = vmul.f32 %v1310, 0.5
    %v1321 = vtanh.pop %v1320
    %v1322 = vadd.f32 %v1321, 1.0
    %v1323 = vmul.f32 %v1322, 0.5
    %v1324 = vmul.f32 %v1318, %v1155
    %v1325 = vmul.f32 %v1314, %v1319
    %v1326 = vadd.f32 %v1324, %v1325
    %v1327 = vtanh.pop %v1326
    %v1328 = vmul.f32 %v1323, %v1327
    %s1329 = smul.u32 5, 4
    %s1330 = smul.addr %s1329, 8
    %s1331 = scalar_lea.vmem [#allocation2], %s1330
    %v1332 = vld [vmem:[%s1331] sm:$0xff]
    %v1333 = vld [vmem:[%s1331 + $0x8] sm:$0xff]
    %v1334 = vld [vmem:[%s1331 + $0x10] sm:$0xff]
    %v1335 = vld [vmem:[%s1331 + $0x18] sm:$0xff]
    %1336 = vmatprep.subr.mxu0 %v418
    %1337 = vmatpush1.msra.mxu0 %v417
    %1338 = vmatprep.subr.mxu0 %v422
    %1339 = vmatpush1.msra.mxu0 %v421
    %1340 = vmatprep.subr.mxu0 %v426
    %1341 = vmatpush1.msra.mxu0 %v425
    %1342 = vmatprep.subr.mxu0 %v430
    %1343 = vmatpush1.msra.mxu0 %v429
    %1344 = vmatprep.subr.mxu0 %v434
    %1345 = vmatpush1.msra.mxu0 %v433
    %1346 = vmatprep.subr.mxu0 %v438
    %1347 = vmatpush1.msra.mxu0 %v437
    %1348 = vmatprep.subr.mxu0 %v442
    %1349 = vmatpush1.msra.mxu0 %v441
    %1350 = vmatprep.subr.mxu0 %v446
    %1351 = vmatpush1.msra.mxu0 %v445
    %1352 = vmatprep.subr.mxu0 %v450
    %1353 = vmatpush1.msra.mxu0 %v449
    %1354 = vmatprep.subr.mxu0 %v454
    %1355 = vmatpush1.msra.mxu0 %v453
    %1356 = vmatprep.subr.mxu0 %v458
    %1357 = vmatpush1.msra.mxu0 %v457
    %1358 = vmatprep.subr.mxu0 %v462
    %1359 = vmatpush1.msra.mxu0 %v461
    %1360 = vmatprep.subr.mxu0 %v466
    %1361 = vmatpush1.msra.mxu0 %v465
    %1362 = vmatprep.subr.mxu0 %v470
    %1363 = vmatpush1.msra.mxu0 %v469
    %1364 = vmatprep.subr.mxu0 %v474
    %1365 = vmatpush1.msra.mxu0 %v473
    %1366 = vmatprep.subr.mxu0 %v478
    %1367 = vmatpush1.msra.mxu0 %v477
    %1368 = vmatprep.subr.mxu0 0.0
    %1369 = vmatpush1.msra.mxu0 0.0
    %1370 = vmatprep.subr.mxu0 0.0
    %1371 = vmatpush1.msra.mxu0 0.0
    %1372 = vmatprep.subr.mxu0 0.0
    %1373 = vmatpush1.msra.mxu0 0.0
    %1374 = vmatprep.subr.mxu0 0.0
    %1375 = vmatpush1.msra.mxu0 0.0
    %1376 = vmatprep.subr.mxu0 0.0
    %1377 = vmatpush1.msra.mxu0 0.0
    %1378 = vmatprep.subr.mxu0 0.0
    %1379 = vmatpush1.msra.mxu0 0.0
    %1380 = vmatprep.subr.mxu0 0.0
    %1381 = vmatpush1.msra.mxu0 0.0
    %1382 = vmatprep.subr.mxu0 0.0
    %1383 = vmatpush1.msra.mxu0 0.0
    %1384 = vmatprep.subr.mxu0 0.0
    %1385 = vmatpush1.msra.mxu0 0.0
    %1386 = vmatprep.subr.mxu0 0.0
    %1387 = vmatpush1.msra.mxu0 0.0
    %1388 = vmatprep.subr.mxu0 0.0
    %1389 = vmatpush1.msra.mxu0 0.0
    %1390 = vmatprep.subr.mxu0 0.0
    %1391 = vmatpush1.msra.mxu0 0.0
    %1392 = vmatprep.subr.mxu0 0.0
    %1393 = vmatpush1.msra.mxu0 0.0
    %1394 = vmatprep.subr.mxu0 0.0
    %1395 = vmatpush1.msra.mxu0 0.0
    %1396 = vmatprep.subr.mxu0 0.0
    %1397 = vmatpush1.msra.mxu0 0.0
    %1398 = vmatprep.subr.mxu0 0.0
    %1399 = vmatpush1.msra.mxu0 0.0
    %1400 = vmatprep.mubr.f32.mxu0 0.0
    %1401 = vmatmul.mubr.f32.gmra.mrb[0].mxu0 %v1328
    %v1402 = vpop.f32.mrb[0].mxu0
    %v1403 = vadd.f32 0.0, %v1402
    %v1404 = vpop.f32.mrb[0].mxu0
    %v1405 = vadd.f32 0.0, %v1404
    %1406 = vdwg.mxu0
    %1407 = vmatprep.subr.mxu0 %v420
    %1408 = vmatpush1.msra.mxu0 %v419
    %1409 = vmatprep.subr.mxu0 %v424
    %1410 = vmatpush1.msra.mxu0 %v423
    %1411 = vmatprep.subr.mxu0 %v428
    %1412 = vmatpush1.msra.mxu0 %v427
    %1413 = vmatprep.subr.mxu0 %v432
    %1414 = vmatpush1.msra.mxu0 %v431
    %1415 = vmatprep.subr.mxu0 %v436
    %1416 = vmatpush1.msra.mxu0 %v435
    %1417 = vmatprep.subr.mxu0 %v440
    %1418 = vmatpush1.msra.mxu0 %v439
    %1419 = vmatprep.subr.mxu0 %v444
    %1420 = vmatpush1.msra.mxu0 %v443
    %1421 = vmatprep.subr.mxu0 %v448
    %1422 = vmatpush1.msra.mxu0 %v447
    %1423 = vmatprep.subr.mxu0 %v452
    %1424 = vmatpush1.msra.mxu0 %v451
    %1425 = vmatprep.subr.mxu0 %v456
    %1426 = vmatpush1.msra.mxu0 %v455
    %1427 = vmatprep.subr.mxu0 %v460
    %1428 = vmatpush1.msra.mxu0 %v459
    %1429 = vmatprep.subr.mxu0 %v464
    %1430 = vmatpush1.msra.mxu0 %v463
    %1431 = vmatprep.subr.mxu0 %v468
    %1432 = vmatpush1.msra.mxu0 %v467
    %1433 = vmatprep.subr.mxu0 %v472
    %1434 = vmatpush1.msra.mxu0 %v471
    %1435 = vmatprep.subr.mxu0 %v476
    %1436 = vmatpush1.msra.mxu0 %v475
    %1437 = vmatprep.subr.mxu0 %v480
    %1438 = vmatpush1.msra.mxu0 %v479
    %1439 = vmatprep.subr.mxu0 0.0
    %1440 = vmatpush1.msra.mxu0 0.0
    %1441 = vmatprep.subr.mxu0 0.0
    %1442 = vmatpush1.msra.mxu0 0.0
    %1443 = vmatprep.subr.mxu0 0.0
    %1444 = vmatpush1.msra.mxu0 0.0
    %1445 = vmatprep.subr.mxu0 0.0
    %1446 = vmatpush1.msra.mxu0 0.0
    %1447 = vmatprep.subr.mxu0 0.0
    %1448 = vmatpush1.msra.mxu0 0.0
    %1449 = vmatprep.subr.mxu0 0.0
    %1450 = vmatpush1.msra.mxu0 0.0
    %1451 = vmatprep.subr.mxu0 0.0
    %1452 = vmatpush1.msra.mxu0 0.0
    %1453 = vmatprep.subr.mxu0 0.0
    %1454 = vmatpush1.msra.mxu0 0.0
    %1455 = vmatprep.subr.mxu0 0.0
    %1456 = vmatpush1.msra.mxu0 0.0
    %1457 = vmatprep.subr.mxu0 0.0
    %1458 = vmatpush1.msra.mxu0 0.0
    %1459 = vmatprep.subr.mxu0 0.0
    %1460 = vmatpush1.msra.mxu0 0.0
    %1461 = vmatprep.subr.mxu0 0.0
    %1462 = vmatpush1.msra.mxu0 0.0
    %1463 = vmatprep.subr.mxu0 0.0
    %1464 = vmatpush1.msra.mxu0 0.0
    %1465 = vmatprep.subr.mxu0 0.0
    %1466 = vmatpush1.msra.mxu0 0.0
    %1467 = vmatprep.subr.mxu0 0.0
    %1468 = vmatpush1.msra.mxu0 0.0
    %1469 = vmatprep.subr.mxu0 0.0
    %1470 = vmatpush1.msra.mxu0 0.0
    %1471 = vmatprep.mubr.f32.mxu0 0.0
    %1472 = vmatmul.mubr.f32.gmra.mrb[0].mxu0 %v1328
    %v1473 = vpop.f32.mrb[0].mxu0
    %v1474 = vadd.f32 0.0, %v1473
    %v1475 = vpop.f32.mrb[0].mxu0
    %v1476 = vadd.f32 0.0, %v1475
    %1477 = vdwg.mxu0
    %v1478 = vadd.f32 %v1332, %v1403
    %v1479 = vadd.f32 %v1333, %v1405
    %v1480 = vadd.f32 %v1334, %v1474
    %v1481 = vadd.f32 %v1335, %v1476
    %v1482 = vmul.f32 %v1478, 0.5
    %v1483 = vtanh.pop %v1482
    %v1484 = vadd.f32 %v1483, 1.0
    %v1485 = vmul.f32 %v1484, 0.5
    %v1486 = vmul.f32 %v1479, 0.5
    %v1487 = vtanh.pop %v1486
    %v1488 = vadd.f32 %v1487, 1.0
    %v1489 = vmul.f32 %v1488, 0.5
    %v1490 = vtanh.pop %v1480
    %v1491 = vmul.f32 %v1481, 0.5
    %v1492 = vtanh.pop %v1491
    %v1493 = vadd.f32 %v1492, 1.0
    %v1494 = vmul.f32 %v1493, 0.5
    %v1495 = vmul.f32 %v1489, %v1326
    %v1496 = vmul.f32 %v1485, %v1490
    %v1497 = vadd.f32 %v1495, %v1496
    %v1498 = vtanh.pop %v1497
    %v1499 = vmul.f32 %v1494, %v1498
    %s1500 = smul.u32 6, 4
    %s1501 = smul.addr %s1500, 8
    %s1502 = scalar_lea.vmem [#allocation2], %s1501
    %v1503 = vld [vmem:[%s1502] sm:$0xff]
    %v1504 = vld [vmem:[%s1502 + $0x8] sm:$0xff]
    %v1505 = vld [vmem:[%s1502 + $0x10] sm:$0xff]
    %v1506 = vld [vmem:[%s1502 + $0x18] sm:$0xff]
    %1507 = vmatprep.subr.mxu0 %v418
    %1508 = vmatpush1.msra.mxu0 %v417
    %1509 = vmatprep.subr.mxu0 %v422
    %1510 = vmatpush1.msra.mxu0 %v421
    %1511 = vmatprep.subr.mxu0 %v426
    %1512 = vmatpush1.msra.mxu0 %v425
    %1513 = vmatprep.subr.mxu0 %v430
    %1514 = vmatpush1.msra.mxu0 %v429
    %1515 = vmatprep.subr.mxu0 %v434
    %1516 = vmatpush1.msra.mxu0 %v433
    %1517 = vmatprep.subr.mxu0 %v438
    %1518 = vmatpush1.msra.mxu0 %v437
    %1519 = vmatprep.subr.mxu0 %v442
    %1520 = vmatpush1.msra.mxu0 %v441
    %1521 = vmatprep.subr.mxu0 %v446
    %1522 = vmatpush1.msra.mxu0 %v445
    %1523 = vmatprep.subr.mxu0 %v450
    %1524 = vmatpush1.msra.mxu0 %v449
    %1525 = vmatprep.subr.mxu0 %v454
    %1526 = vmatpush1.msra.mxu0 %v453
    %1527 = vmatprep.subr.mxu0 %v458
    %1528 = vmatpush1.msra.mxu0 %v457
    %1529 = vmatprep.subr.mxu0 %v462
    %1530 = vmatpush1.msra.mxu0 %v461
    %1531 = vmatprep.subr.mxu0 %v466
    %1532 = vmatpush1.msra.mxu0 %v465
    %1533 = vmatprep.subr.mxu0 %v470
    %1534 = vmatpush1.msra.mxu0 %v469
    %1535 = vmatprep.subr.mxu0 %v474
    %1536 = vmatpush1.msra.mxu0 %v473
    %1537 = vmatprep.subr.mxu0 %v478
    %1538 = vmatpush1.msra.mxu0 %v477
    %1539 = vmatprep.subr.mxu0 0.0
    %1540 = vmatpush1.msra.mxu0 0.0
    %1541 = vmatprep.subr.mxu0 0.0
    %1542 = vmatpush1.msra.mxu0 0.0
    %1543 = vmatprep.subr.mxu0 0.0
    %1544 = vmatpush1.msra.mxu0 0.0
    %1545 = vmatprep.subr.mxu0 0.0
    %1546 = vmatpush1.msra.mxu0 0.0
    %1547 = vmatprep.subr.mxu0 0.0
    %1548 = vmatpush1.msra.mxu0 0.0
    %1549 = vmatprep.subr.mxu0 0.0
    %1550 = vmatpush1.msra.mxu0 0.0
    %1551 = vmatprep.subr.mxu0 0.0
    %1552 = vmatpush1.msra.mxu0 0.0
    %1553 = vmatprep.subr.mxu0 0.0
    %1554 = vmatpush1.msra.mxu0 0.0
    %1555 = vmatprep.subr.mxu0 0.0
    %1556 = vmatpush1.msra.mxu0 0.0
    %1557 = vmatprep.subr.mxu0 0.0
    %1558 = vmatpush1.msra.mxu0 0.0
    %1559 = vmatprep.subr.mxu0 0.0
    %1560 = vmatpush1.msra.mxu0 0.0
    %1561 = vmatprep.subr.mxu0 0.0
    %1562 = vmatpush1.msra.mxu0 0.0
    %1563 = vmatprep.subr.mxu0 0.0
    %1564 = vmatpush1.msra.mxu0 0.0
    %1565 = vmatprep.subr.mxu0 0.0
    %1566 = vmatpush1.msra.mxu0 0.0
    %1567 = vmatprep.subr.mxu0 0.0
    %1568 = vmatpush1.msra.mxu0 0.0
    %1569 = vmatprep.subr.mxu0 0.0
    %1570 = vmatpush1.msra.mxu0 0.0
    %1571 = vmatprep.mubr.f32.mxu0 0.0
    %1572 = vmatmul.mubr.f32.gmra.mrb[0].mxu0 %v1499
    %v1573 = vpop.f32.mrb[0].mxu0
    %v1574 = vadd.f32 0.0, %v1573
    %v1575 = vpop.f32.mrb[0].mxu0
    %v1576 = vadd.f32 0.0, %v1575
    %1577 = vdwg.mxu0
    %1578 = vmatprep.subr.mxu0 %v420
    %1579 = vmatpush1.msra.mxu0 %v419
    %1580 = vmatprep.subr.mxu0 %v424
    %1581 = vmatpush1.msra.mxu0 %v423
    %1582 = vmatprep.subr.mxu0 %v428
    %1583 = vmatpush1.msra.mxu0 %v427
    %1584 = vmatprep.subr.mxu0 %v432
    %1585 = vmatpush1.msra.mxu0 %v431
    %1586 = vmatprep.subr.mxu0 %v436
    %1587 = vmatpush1.msra.mxu0 %v435
    %1588 = vmatprep.subr.mxu0 %v440
    %1589 = vmatpush1.msra.mxu0 %v439
    %1590 = vmatprep.subr.mxu0 %v444
    %1591 = vmatpush1.msra.mxu0 %v443
    %1592 = vmatprep.subr.mxu0 %v448
    %1593 = vmatpush1.msra.mxu0 %v447
    %1594 = vmatprep.subr.mxu0 %v452
    %1595 = vmatpush1.msra.mxu0 %v451
    %1596 = vmatprep.subr.mxu0 %v456
    %1597 = vmatpush1.msra.mxu0 %v455
    %1598 = vmatprep.subr.mxu0 %v460
    %1599 = vmatpush1.msra.mxu0 %v459
    %1600 = vmatprep.subr.mxu0 %v464
    %1601 = vmatpush1.msra.mxu0 %v463
    %1602 = vmatprep.subr.mxu0 %v468
    %1603 = vmatpush1.msra.mxu0 %v467
    %1604 = vmatprep.subr.mxu0 %v472
    %1605 = vmatpush1.msra.mxu0 %v471
    %1606 = vmatprep.subr.mxu0 %v476
    %1607 = vmatpush1.msra.mxu0 %v475
    %1608 = vmatprep.subr.mxu0 %v480
    %1609 = vmatpush1.msra.mxu0 %v479
    %1610 = vmatprep.subr.mxu0 0.0
    %1611 = vmatpush1.msra.mxu0 0.0
    %1612 = vmatprep.subr.mxu0 0.0
    %1613 = vmatpush1.msra.mxu0 0.0
    %1614 = vmatprep.subr.mxu0 0.0
    %1615 = vmatpush1.msra.mxu0 0.0
    %1616 = vmatprep.subr.mxu0 0.0
    %1617 = vmatpush1.msra.mxu0 0.0
    %1618 = vmatprep.subr.mxu0 0.0
    %1619 = vmatpush1.msra.mxu0 0.0
    %1620 = vmatprep.subr.mxu0 0.0
    %1621 = vmatpush1.msra.mxu0 0.0
    %1622 = vmatprep.subr.mxu0 0.0
    %1623 = vmatpush1.msra.mxu0 0.0
    %1624 = vmatprep.subr.mxu0 0.0
    %1625 = vmatpush1.msra.mxu0 0.0
    %1626 = vmatprep.subr.mxu0 0.0
    %1627 = vmatpush1.msra.mxu0 0.0
    %1628 = vmatprep.subr.mxu0 0.0
    %1629 = vmatpush1.msra.mxu0 0.0
    %1630 = vmatprep.subr.mxu0 0.0
    %1631 = vmatpush1.msra.mxu0 0.0
    %1632 = vmatprep.subr.mxu0 0.0
    %1633 = vmatpush1.msra.mxu0 0.0
    %1634 = vmatprep.subr.mxu0 0.0
    %1635 = vmatpush1.msra.mxu0 0.0
    %1636 = vmatprep.subr.mxu0 0.0
    %1637 = vmatpush1.msra.mxu0 0.0
    %1638 = vmatprep.subr.mxu0 0.0
    %1639 = vmatpush1.msra.mxu0 0.0
    %1640 = vmatprep.subr.mxu0 0.0
    %1641 = vmatpush1.msra.mxu0 0.0
    %1642 = vmatprep.mubr.f32.mxu0 0.0
    %1643 = vmatmul.mubr.f32.gmra.mrb[0].mxu0 %v1499
    %v1644 = vpop.f32.mrb[0].mxu0
    %v1645 = vadd.f32 0.0, %v1644
    %v1646 = vpop.f32.mrb[0].mxu0
    %v1647 = vadd.f32 0.0, %v1646
    %1648 = vdwg.mxu0
    %v1649 = vadd.f32 %v1503, %v1574
    %v1650 = vadd.f32 %v1504, %v1576
    %v1651 = vadd.f32 %v1505, %v1645
    %v1652 = vadd.f32 %v1506, %v1647
    %v1653 = vmul.f32 %v1649, 0.5
    %v1654 = vtanh.pop %v1653
    %v1655 = vadd.f32 %v1654, 1.0
    %v1656 = vmul.f32 %v1655, 0.5
    %v1657 = vmul.f32 %v1650, 0.5
    %v1658 = vtanh.pop %v1657
    %v1659 = vadd.f32 %v1658, 1.0
    %v1660 = vmul.f32 %v1659, 0.5
    %v1661 = vtanh.pop %v1651
    %v1662 = vmul.f32 %v1652, 0.5
    %v1663 = vtanh.pop %v1662
    %v1664 = vadd.f32 %v1663, 1.0
    %v1665 = vmul.f32 %v1664, 0.5
    %v1666 = vmul.f32 %v1660, %v1497
    %v1667 = vmul.f32 %v1656, %v1661
    %v1668 = vadd.f32 %v1666, %v1667
    %v1669 = vtanh.pop %v1668
    %v1670 = vmul.f32 %v1665, %v1669
    %s1671 = smul.u32 7, 4
    %s1672 = smul.addr %s1671, 8
    %s1673 = scalar_lea.vmem [#allocation2], %s1672
    %v1674 = vld [vmem:[%s1673] sm:$0xff]
    %v1675 = vld [vmem:[%s1673 + $0x8] sm:$0xff]
    %v1676 = vld [vmem:[%s1673 + $0x10] sm:$0xff]
    %v1677 = vld [vmem:[%s1673 + $0x18] sm:$0xff]
    %1678 = vmatprep.subr.mxu0 %v418
    %1679 = vmatpush1.msra.mxu0 %v417
    %1680 = vmatprep.subr.mxu0 %v422
    %1681 = vmatpush1.msra.mxu0 %v421
    %1682 = vmatprep.subr.mxu0 %v426
    %1683 = vmatpush1.msra.mxu0 %v425
    %1684 = vmatprep.subr.mxu0 %v430
    %1685 = vmatpush1.msra.mxu0 %v429
    %1686 = vmatprep.subr.mxu0 %v434
    %1687 = vmatpush1.msra.mxu0 %v433
    %1688 = vmatprep.subr.mxu0 %v438
    %1689 = vmatpush1.msra.mxu0 %v437
    %1690 = vmatprep.subr.mxu0 %v442
    %1691 = vmatpush1.msra.mxu0 %v441
    %1692 = vmatprep.subr.mxu0 %v446
    %1693 = vmatpush1.msra.mxu0 %v445
    %1694 = vmatprep.subr.mxu0 %v450
    %1695 = vmatpush1.msra.mxu0 %v449
    %1696 = vmatprep.subr.mxu0 %v454
    %1697 = vmatpush1.msra.mxu0 %v453
    %1698 = vmatprep.subr.mxu0 %v458
    %1699 = vmatpush1.msra.mxu0 %v457
    %1700 = vmatprep.subr.mxu0 %v462
    %1701 = vmatpush1.msra.mxu0 %v461
    %1702 = vmatprep.subr.mxu0 %v466
    %1703 = vmatpush1.msra.mxu0 %v465
    %1704 = vmatprep.subr.mxu0 %v470
    %1705 = vmatpush1.msra.mxu0 %v469
    %1706 = vmatprep.subr.mxu0 %v474
    %1707 = vmatpush1.msra.mxu0 %v473
    %1708 = vmatprep.subr.mxu0 %v478
    %1709 = vmatpush1.msra.mxu0 %v477
    %1710 = vmatprep.subr.mxu0 0.0
    %1711 = vmatpush1.msra.mxu0 0.0
    %1712 = vmatprep.subr.mxu0 0.0
    %1713 = vmatpush1.msra.mxu0 0.0
    %1714 = vmatprep.subr.mxu0 0.0
    %1715 = vmatpush1.msra.mxu0 0.0
    %1716 = vmatprep.subr.mxu0 0.0
    %1717 = vmatpush1.msra.mxu0 0.0
    %1718 = vmatprep.subr.mxu0 0.0
    %1719 = vmatpush1.msra.mxu0 0.0
    %1720 = vmatprep.subr.mxu0 0.0
    %1721 = vmatpush1.msra.mxu0 0.0
    %1722 = vmatprep.subr.mxu0 0.0
    %1723 = vmatpush1.msra.mxu0 0.0
    %1724 = vmatprep.subr.mxu0 0.0
    %1725 = vmatpush1.msra.mxu0 0.0
    %1726 = vmatprep.subr.mxu0 0.0
    %1727 = vmatpush1.msra.mxu0 0.0
    %1728 = vmatprep.subr.mxu0 0.0
    %1729 = vmatpush1.msra.mxu0 0.0
    %1730 = vmatprep.subr.mxu0 0.0
    %1731 = vmatpush1.msra.mxu0 0.0
    %1732 = vmatprep.subr.mxu0 0.0
    %1733 = vmatpush1.msra.mxu0 0.0
    %1734 = vmatprep.subr.mxu0 0.0
    %1735 = vmatpush1.msra.mxu0 0.0
    %1736 = vmatprep.subr.mxu0 0.0
    %1737 = vmatpush1.msra.mxu0 0.0
    %1738 = vmatprep.subr.mxu0 0.0
    %1739 = vmatpush1.msra.mxu0 0.0
    %1740 = vmatprep.subr.mxu0 0.0
    %1741 = vmatpush1.msra.mxu0 0.0
    %1742 = vmatprep.mubr.f32.mxu0 0.0
    %1743 = vmatmul.mubr.f32.gmra.mrb[0].mxu0 %v1670
    %v1744 = vpop.f32.mrb[0].mxu0
    %v1745 = vadd.f32 0.0, %v1744
    %v1746 = vpop.f32.mrb[0].mxu0
    %v1747 = vadd.f32 0.0, %v1746
    %1748 = vdwg.mxu0
    %1749 = vmatprep.subr.mxu0 %v420
    %1750 = vmatpush1.msra.mxu0 %v419
    %1751 = vmatprep.subr.mxu0 %v424
    %1752 = vmatpush1.msra.mxu0 %v423
    %1753 = vmatprep.subr.mxu0 %v428
    %1754 = vmatpush1.msra.mxu0 %v427
    %1755 = vmatprep.subr.mxu0 %v432
    %1756 = vmatpush1.msra.mxu0 %v431
    %1757 = vmatprep.subr.mxu0 %v436
    %1758 = vmatpush1.msra.mxu0 %v435
    %1759 = vmatprep.subr.mxu0 %v440
    %1760 = vmatpush1.msra.mxu0 %v439
    %1761 = vmatprep.subr.mxu0 %v444
    %1762 = vmatpush1.msra.mxu0 %v443
    %1763 = vmatprep.subr.mxu0 %v448
    %1764 = vmatpush1.msra.mxu0 %v447
    %1765 = vmatprep.subr.mxu0 %v452
    %1766 = vmatpush1.msra.mxu0 %v451
    %1767 = vmatprep.subr.mxu0 %v456
    %1768 = vmatpush1.msra.mxu0 %v455
    %1769 = vmatprep.subr.mxu0 %v460
    %1770 = vmatpush1.msra.mxu0 %v459
    %1771 = vmatprep.subr.mxu0 %v464
    %1772 = vmatpush1.msra.mxu0 %v463
    %1773 = vmatprep.subr.mxu0 %v468
    %1774 = vmatpush1.msra.mxu0 %v467
    %1775 = vmatprep.subr.mxu0 %v472
    %1776 = vmatpush1.msra.mxu0 %v471
    %1777 = vmatprep.subr.mxu0 %v476
    %1778 = vmatpush1.msra.mxu0 %v475
    %1779 = vmatprep.subr.mxu0 %v480
    %1780 = vmatpush1.msra.mxu0 %v479
    %1781 = vmatprep.subr.mxu0 0.0
    %1782 = vmatpush1.msra.mxu0 0.0
    %1783 = vmatprep.subr.mxu0 0.0
    %1784 = vmatpush1.msra.mxu0 0.0
    %1785 = vmatprep.subr.mxu0 0.0
    %1786 = vmatpush1.msra.mxu0 0.0
    %1787 = vmatprep.subr.mxu0 0.0
    %1788 = vmatpush1.msra.mxu0 0.0
    %1789 = vmatprep.subr.mxu0 0.0
    %1790 = vmatpush1.msra.mxu0 0.0
    %1791 = vmatprep.subr.mxu0 0.0
    %1792 = vmatpush1.msra.mxu0 0.0
    %1793 = vmatprep.subr.mxu0 0.0
    %1794 = vmatpush1.msra.mxu0 0.0
    %1795 = vmatprep.subr.mxu0 0.0
    %1796 = vmatpush1.msra.mxu0 0.0
    %1797 = vmatprep.subr.mxu0 0.0
    %1798 = vmatpush1.msra.mxu0 0.0
    %1799 = vmatprep.subr.mxu0 0.0
    %1800 = vmatpush1.msra.mxu0 0.0
    %1801 = vmatprep.subr.mxu0 0.0
    %1802 = vmatpush1.msra.mxu0 0.0
    %1803 = vmatprep.subr.mxu0 0.0
    %1804 = vmatpush1.msra.mxu0 0.0
    %1805 = vmatprep.subr.mxu0 0.0
    %1806 = vmatpush1.msra.mxu0 0.0
    %1807 = vmatprep.subr.mxu0 0.0
    %1808 = vmatpush1.msra.mxu0 0.0
    %1809 = vmatprep.subr.mxu0 0.0
    %1810 = vmatpush1.msra.mxu0 0.0
    %1811 = vmatprep.subr.mxu0 0.0
    %1812 = vmatpush1.msra.mxu0 0.0
    %1813 = vmatprep.mubr.f32.mxu0 0.0
    %1814 = vmatmul.mubr.f32.gmra.mrb[0].mxu0 %v1670
    %v1815 = vpop.f32.mrb[0].mxu0
    %v1816 = vadd.f32 0.0, %v1815
    %v1817 = vpop.f32.mrb[0].mxu0
    %v1818 = vadd.f32 0.0, %v1817
    %1819 = vdwg.mxu0
    %v1820 = vadd.f32 %v1674, %v1745
    %v1821 = vadd.f32 %v1675, %v1747
    %v1822 = vadd.f32 %v1676, %v1816
    %v1823 = vadd.f32 %v1677, %v1818
    %v1824 = vmul.f32 %v1820, 0.5
    %v1825 = vtanh.pop %v1824
    %v1826 = vadd.f32 %v1825, 1.0
    %v1827 = vmul.f32 %v1826, 0.5
    %v1828 = vmul.f32 %v1821, 0.5
    %v1829 = vtanh.pop %v1828
    %v1830 = vadd.f32 %v1829, 1.0
    %v1831 = vmul.f32 %v1830, 0.5
    %v1832 = vtanh.pop %v1822
    %v1833 = vmul.f32 %v1823, 0.5
    %v1834 = vtanh.pop %v1833
    %v1835 = vadd.f32 %v1834, 1.0
    %v1836 = vmul.f32 %v1835, 0.5
    %v1837 = vmul.f32 %v1831, %v1668
    %v1838 = vmul.f32 %v1827, %v1832
    %v1839 = vadd.f32 %v1837, %v1838
    %v1840 = vtanh.pop %v1839
    %v1841 = vmul.f32 %v1836, %v1840
    %v1842 = vld [vmem:[#allocation9] sm:$0xff]
    %v1843 = vld [vmem:[#allocation9 + $0x8] sm:$0xff]
    %v1844 = vld [vmem:[#allocation9 + $0x10] sm:$0xff]
    %v1845 = vld [vmem:[#allocation9 + $0x18] sm:$0xff]
    %v1846 = vld [vmem:[#allocation9 + $0x20] sm:$0xff]
    %v1847 = vld [vmem:[#allocation9 + $0x28] sm:$0xff]
    %v1848 = vld [vmem:[#allocation9 + $0x30] sm:$0xff]
    %v1849 = vld [vmem:[#allocation9 + $0x38] sm:$0xff]
    %v1850 = vld [vmem:[#allocation9 + $0x40] sm:$0xff]
    %v1851 = vld [vmem:[#allocation9 + $0x48] sm:$0xff]
    %v1852 = vld [vmem:[#allocation9 + $0x50] sm:$0xff]
    %v1853 = vld [vmem:[#allocation9 + $0x58] sm:$0xff]
    %v1854 = vld [vmem:[#allocation9 + $0x60] sm:$0xff]
    %v1855 = vld [vmem:[#allocation9 + $0x68] sm:$0xff]
    %v1856 = vld [vmem:[#allocation9 + $0x70] sm:$0xff]
    %v1857 = vld [vmem:[#allocation9 + $0x78] sm:$0xff]
    %v1858 = vld [vmem:[#allocation9 + $0x80] sm:$0xff]
    %v1859 = vld [vmem:[#allocation9 + $0x88] sm:$0xff]
    %v1860 = vld [vmem:[#allocation9 + $0x90] sm:$0xff]
    %v1861 = vld [vmem:[#allocation9 + $0x98] sm:$0xff]
    %v1862 = vld [vmem:[#allocation9 + $0xa0] sm:$0xff]
    %v1863 = vld [vmem:[#allocation9 + $0xa8] sm:$0xff]
    %v1864 = vld [vmem:[#allocation9 + $0xb0] sm:$0xff]
    %v1865 = vld [vmem:[#allocation9 + $0xb8] sm:$0xff]
    %v1866 = vld [vmem:[#allocation9 + $0xc0] sm:$0xff]
    %v1867 = vld [vmem:[#allocation9 + $0xc8] sm:$0xff]
    %v1868 = vld [vmem:[#allocation9 + $0xd0] sm:$0xff]
    %v1869 = vld [vmem:[#allocation9 + $0xd8] sm:$0xff]
    %v1870 = vld [vmem:[#allocation9 + $0xe0] sm:$0xff]
    %v1871 = vld [vmem:[#allocation9 + $0xe8] sm:$0xff]
    %v1872 = vld [vmem:[#allocation9 + $0xf0] sm:$0xff]
    %v1873 = vld [vmem:[#allocation9 + $0xf8] sm:$0xff]
    %v1874 = vld [vmem:[#allocation9 + $0x100] sm:$0x1]
    %v1875 = vld [vmem:[#allocation9 + $0x101] sm:$0x1]
    %v1876 = vlaneseq
    %v1877 = vshrl.u32 %v1876, 7
    %v1878 = vsub.s32 0, %v1877
    %v1879 = vrot.slane %v1874, %v1878
    %1880 = vmatprep.subr.mxu0 0.0
    %1881 = vmatpush1.msra.mxu0 %v1842
    %1882 = vmatprep.subr.mxu0 0.0
    %1883 = vmatpush1.msra.mxu0 %v1843
    %1884 = vmatprep.subr.mxu0 0.0
    %1885 = vmatpush1.msra.mxu0 %v1844
    %1886 = vmatprep.subr.mxu0 0.0
    %1887 = vmatpush1.msra.mxu0 %v1845
    %1888 = vmatprep.subr.mxu0 0.0
    %1889 = vmatpush1.msra.mxu0 %v1846
    %1890 = vmatprep.subr.mxu0 0.0
    %1891 = vmatpush1.msra.mxu0 %v1847
    %1892 = vmatprep.subr.mxu0 0.0
    %1893 = vmatpush1.msra.mxu0 %v1848
    %1894 = vmatprep.subr.mxu0 0.0
    %1895 = vmatpush1.msra.mxu0 %v1849
    %1896 = vmatprep.subr.mxu0 0.0
    %1897 = vmatpush1.msra.mxu0 %v1850
    %1898 = vmatprep.subr.mxu0 0.0
    %1899 = vmatpush1.msra.mxu0 %v1851
    %1900 = vmatprep.subr.mxu0 0.0
    %1901 = vmatpush1.msra.mxu0 %v1852
    %1902 = vmatprep.subr.mxu0 0.0
    %1903 = vmatpush1.msra.mxu0 %v1853
    %1904 = vmatprep.subr.mxu0 0.0
    %1905 = vmatpush1.msra.mxu0 %v1854
    %1906 = vmatprep.subr.mxu0 0.0
    %1907 = vmatpush1.msra.mxu0 %v1855
    %1908 = vmatprep.subr.mxu0 0.0
    %1909 = vmatpush1.msra.mxu0 %v1856
    %1910 = vmatprep.subr.mxu0 0.0
    %1911 = vmatpush1.msra.mxu0 %v1857
    %1912 = vmatprep.subr.mxu0 0.0
    %1913 = vmatpush1.msra.mxu0 0.0
    %1914 = vmatprep.subr.mxu0 0.0
    %1915 = vmatpush1.msra.mxu0 0.0
    %1916 = vmatprep.subr.mxu0 0.0
    %1917 = vmatpush1.msra.mxu0 0.0
    %1918 = vmatprep.subr.mxu0 0.0
    %1919 = vmatpush1.msra.mxu0 0.0
    %1920 = vmatprep.subr.mxu0 0.0
    %1921 = vmatpush1.msra.mxu0 0.0
    %1922 = vmatprep.subr.mxu0 0.0
    %1923 = vmatpush1.msra.mxu0 0.0
    %1924 = vmatprep.subr.mxu0 0.0
    %1925 = vmatpush1.msra.mxu0 0.0
    %1926 = vmatprep.subr.mxu0 0.0
    %1927 = vmatpush1.msra.mxu0 0.0
    %1928 = vmatprep.subr.mxu0 0.0
    %1929 = vmatpush1.msra.mxu0 0.0
    %1930 = vmatprep.subr.mxu0 0.0
    %1931 = vmatpush1.msra.mxu0 0.0
    %1932 = vmatprep.subr.mxu0 0.0
    %1933 = vmatpush1.msra.mxu0 0.0
    %1934 = vmatprep.subr.mxu0 0.0
    %1935 = vmatpush1.msra.mxu0 0.0
    %1936 = vmatprep.subr.mxu0 0.0
    %1937 = vmatpush1.msra.mxu0 0.0
    %1938 = vmatprep.subr.mxu0 0.0
    %1939 = vmatpush1.msra.mxu0 0.0
    %1940 = vmatprep.subr.mxu0 0.0
    %1941 = vmatpush1.msra.mxu0 0.0
    %1942 = vmatprep.subr.mxu0 0.0
    %1943 = vmatpush1.msra.mxu0 0.0
    %1944 = vmatprep.mubr.f32.mxu0 0.0
    %1945 = vmatmul.mubr.f32.gmra.mrb[0].mxu0 %v1841
    %v1946 = vpop.f32.mrb[0].mxu0
    %v1947 = vadd.f32 %v1879, %v1946
    %v1948 = vpop.f32.mrb[0].mxu0
    %1949 = vdwg.mxu0
    %v1950 = vmul.f32 %v1947, 0.5
    %v1951 = vtanh.pop %v1950
    %v1952 = vadd.f32 %v1951, 1.0
    %v1953 = vmul.f32 %v1952, 0.5
    %v1954 = vlaneseq
    %v1955 = vshrl.u32 %v1954, 7
    %v1956 = vsub.s32 0, %v1955
    %v1957 = vrot.slane %v1875, %v1956
    %1958 = vmatprep.subr.mxu0 0.0
    %1959 = vmatpush1.msra.mxu0 %v1858
    %1960 = vmatprep.subr.mxu0 0.0
    %1961 = vmatpush1.msra.mxu0 %v1859
    %1962 = vmatprep.subr.mxu0 0.0
    %1963 = vmatpush1.msra.mxu0 %v1860
    %1964 = vmatprep.subr.mxu0 0.0
    %1965 = vmatpush1.msra.mxu0 %v1861
    %1966 = vmatprep.subr.mxu0 0.0
    %1967 = vmatpush1.msra.mxu0 %v1862
    %1968 = vmatprep.subr.mxu0 0.0
    %1969 = vmatpush1.msra.mxu0 %v1863
    %1970 = vmatprep.subr.mxu0 0.0
    %1971 = vmatpush1.msra.mxu0 %v1864
    %1972 = vmatprep.subr.mxu0 0.0
    %1973 = vmatpush1.msra.mxu0 %v1865
    %1974 = vmatprep.subr.mxu0 0.0
    %1975 = vmatpush1.msra.mxu0 %v1866
    %1976 = vmatprep.subr.mxu0 0.0
    %1977 = vmatpush1.msra.mxu0 %v1867
    %1978 = vmatprep.subr.mxu0 0.0
    %1979 = vmatpush1.msra.mxu0 %v1868
    %1980 = vmatprep.subr.mxu0 0.0
    %1981 = vmatpush1.msra.mxu0 %v1869
    %1982 = vmatprep.subr.mxu0 0.0
    %1983 = vmatpush1.msra.mxu0 %v1870
    %1984 = vmatprep.subr.mxu0 0.0
    %1985 = vmatpush1.msra.mxu0 %v1871
    %1986 = vmatprep.subr.mxu0 0.0
    %1987 = vmatpush1.msra.mxu0 %v1872
    %1988 = vmatprep.subr.mxu0 0.0
    %1989 = vmatpush1.msra.mxu0 %v1873
    %1990 = vmatprep.subr.mxu0 0.0
    %1991 = vmatpush1.msra.mxu0 0.0
    %1992 = vmatprep.subr.mxu0 0.0
    %1993 = vmatpush1.msra.mxu0 0.0
    %1994 = vmatprep.subr.mxu0 0.0
    %1995 = vmatpush1.msra.mxu0 0.0
    %1996 = vmatprep.subr.mxu0 0.0
    %1997 = vmatpush1.msra.mxu0 0.0
    %1998 = vmatprep.subr.mxu0 0.0
    %1999 = vmatpush1.msra.mxu0 0.0
    %2000 = vmatprep.subr.mxu0 0.0
    %2001 = vmatpush1.msra.mxu0 0.0
    %2002 = vmatprep.subr.mxu0 0.0
    %2003 = vmatpush1.msra.mxu0 0.0
    %2004 = vmatprep.subr.mxu0 0.0
    %2005 = vmatpush1.msra.mxu0 0.0
    %2006 = vmatprep.subr.mxu0 0.0
    %2007 = vmatpush1.msra.mxu0 0.0
    %2008 = vmatprep.subr.mxu0 0.0
    %2009 = vmatpush1.msra.mxu0 0.0
    %2010 = vmatprep.subr.mxu0 0.0
    %2011 = vmatpush1.msra.mxu0 0.0
    %2012 = vmatprep.subr.mxu0 0.0
    %2013 = vmatpush1.msra.mxu0 0.0
    %2014 = vmatprep.subr.mxu0 0.0
    %2015 = vmatpush1.msra.mxu0 0.0
    %2016 = vmatprep.subr.mxu0 0.0
    %2017 = vmatpush1.msra.mxu0 0.0
    %2018 = vmatprep.subr.mxu0 0.0
    %2019 = vmatpush1.msra.mxu0 0.0
    %2020 = vmatprep.subr.mxu0 0.0
    %2021 = vmatpush1.msra.mxu0 0.0
    %2022 = vmatprep.mubr.f32.mxu0 0.0
    %2023 = vmatmul.mubr.f32.gmra.mrb[0].mxu0 %v1953
    %v2024 = vpop.f32.mrb[0].mxu0
    %v2025 = vadd.f32 %v1957, %v2024
    %v2026 = vpop.f32.mrb[0].mxu0
    %2027 = vdwg.mxu0
    %2028 = vst [vmem:[%s4] sm:$0xff] %v2025
    %2029 = vst [vmem:[#allocation11] sm:$0xff] %v1841
    // Predicated region
    $region34: #{simple_lstm_forward.1} parent=1 // pred_check
      _
    $region35: #{simple_lstm_forward.1} parent=1 // pred_check_branch
      %2031 = sbr.rel (0) target = $region37
    $region36: #{simple_lstm_forward.1} parent=1 // pred_region
      _
    $region37: #{simple_lstm_forward.1} parent=1 // pred_fallthru
      _
    // Predicated region
    $region38: #{simple_lstm_forward.1} parent=1 // pred_check
      _
    $region39: #{simple_lstm_forward.1} parent=1 // pred_check_branch
      %2033 = sbr.rel (0) target = $region41
    $region40: #{simple_lstm_forward.1} parent=1 // pred_region
      %s2035 = ssub.s32 128, 128
      %2036 = vsyncadd [#allocation5], %s2035
      %s2038 = sshll.u32 [#allocation11], 4
      %s2039 = int_to_ptr.vmem [resolvable:$true] %s2038
      %2041 = dma.vmem_to_hbm [thread:$0]  %s2039, 128, %s5, [#allocation5]
    $region41: #{simple_lstm_forward.1} parent=1 // pred_fallthru
      _
    // Predicated region
    $region42: #{simple_lstm_forward.1} parent=1 // pred_check
      _
    $region43: #{simple_lstm_forward.1} parent=1 // pred_check_branch
      %2043 = sbr.rel (0) target = $region45
    $region44: #{simple_lstm_forward.1} parent=1 // pred_region
      _
    $region45: #{simple_lstm_forward.1} parent=1 // pred_fallthru
      _
    // Predicated region
    $region46: #{simple_lstm_forward.1} parent=1 // pred_check
      _
    $region47: #{simple_lstm_forward.1} parent=1 // pred_check_branch
      %2045 = sbr.rel (0) target = $region49
    $region48: #{simple_lstm_forward.1} parent=1 // pred_region
      %2046 = dma.done [#allocation5], 128
    $region49: #{simple_lstm_forward.1} parent=1 // pred_fallthru
      _
    %2047 = vsyncpa [#allocation4], 1
    %2048 = vsyncpa [#allocation7], 1
    %2049 = vsyncpa [#allocation10], 1
    %2050 = vsyncpa [#allocation5], 1

</llo_original>
